<compile_context>
chip_gen: v5e
topology: v5e:2x2
jax: 0.10.0
libtpu: 0.0.40
codegen_flags: <defaults>
</compile_context>

<pallas_src>
import functools

import jax
import jax.numpy as jnp
from jax.experimental import pallas as pl
from jax.experimental.pallas import tpu as pltpu


def _round_up(n, m):
    return ((n + m - 1) // m) * m


def _init_fixed_frequency_matrix(size, scale=1.0):
    # Mirrors torch.linspace(-scale, scale, steps=rows*cols).view(size)
    num_elements = size[0] * size[1]
    lin = jnp.linspace(-scale, scale, num=num_elements, dtype=jnp.float32)
    return lin.reshape(size)


@functools.lru_cache(maxsize=None)
def _device_kind():
    try:
        return jax.devices()[0].device_kind.lower()
    except Exception:
        return ""


def _is_legacy_tpu():
    """v5 and older: 128x128 MXU, no bf16 VPU/EUP."""
    return any(s in _device_kind() for s in ("v2", "v3", "v4", "v5"))


@functools.lru_cache(maxsize=None)
def _bf16_eup_supported():
    """Probe-compile a tiny bf16 sin/tanh kernel; fall back to f32 EUP math."""
    if _is_legacy_tpu():
        return False

    def probe(x_ref, o_ref):
        o_ref[...] = jnp.tanh(jnp.sin(x_ref[...]))

    try:
        x = jnp.zeros((16, 256), jnp.bfloat16)
        out = pl.pallas_call(
            probe, out_shape=jax.ShapeDtypeStruct((16, 256), jnp.bfloat16))(x)
        jax.block_until_ready(out)
        return True
    except Exception:
        return False


# --------------------------------------------------------------------------
# Kernels
# --------------------------------------------------------------------------
def _fused_kernel(xt_ref, bxx_ref, btt_ref, phase_ref,
                  w_path_ref, b_path_ref, w_out_ref, b_out_ref,
                  out_ref, *, eup_dtype):
    """v6e/v7x path: one 256-wide blockdiag MXU pass, one tanh, bf16 EUP."""
    xt = xt_ref[...]                         # (TILE, 2) f32
    x = xt[:, 0:1]                           # (TILE, 1)
    t = xt[:, 1:2]                           # (TILE, 1)

    # Lane-dense fused Fourier features over all 256 lanes:
    #   arg = [x*Bx, x*Bx + pi/2, t*Bt, t*Bt + pi/2]
    #   sin(arg) = [sin(xBx), cos(xBx), sin(tBt), cos(tBt)] = [x_f | t_f]
    arg = x * bxx_ref[...] + t * btt_ref[...] + phase_ref[...]          # (TILE,256) f32
    u = jnp.sin(arg.astype(eup_dtype)).astype(jnp.bfloat16)             # EUP

    # Fused path_x / path_t: blockdiag(WxT, WtT), f32 accumulation.
    z = jnp.dot(u, w_path_ref[...],
                preferred_element_type=jnp.float32) + b_path_ref[...]   # (TILE,256)
    h = jnp.tanh(z.astype(eup_dtype))                                   # EUP

    d = h.shape[-1] // 2                     # 128 (vreg-aligned split)
    comb = (h[:, :d] * h[:, d:]).astype(jnp.bfloat16)                   # (TILE,128)

    # Folded ffn + final_layer, zero-padded to 128 lane-dense output columns.
    out_ref[...] = (jnp.dot(comb, w_out_ref[...],
                            preferred_element_type=jnp.float32)
                    + b_out_ref[...]).astype(out_ref.dtype)             # (TILE,128)


def _split_kernel(xt_ref, bx2_ref, bt2_ref, phase_ref,
                  wx_ref, bx_ref, wt_ref, bt_ref,
                  w_out_ref, b_out_ref, out_ref, *, eup_dtype):
    """Legacy (v5e and older) path: two 128x128 dots, f32 EUP math."""
    xt = xt_ref[...]
    x = xt[:, 0:1]
    t = xt[:, 1:2]

    ux = jnp.sin((x * bx2_ref[...] + phase_ref[...]).astype(eup_dtype)
                 ).astype(jnp.bfloat16)                                 # (TILE,128)
    ut = jnp.sin((t * bt2_ref[...] + phase_ref[...]).astype(eup_dtype)
                 ).astype(jnp.bfloat16)                                 # (TILE,128)

    hx = jnp.tanh((jnp.dot(ux, wx_ref[...], preferred_element_type=jnp.float32)
                   + bx_ref[...]).astype(eup_dtype))
    ht = jnp.tanh((jnp.dot(ut, wt_ref[...], preferred_element_type=jnp.float32)
                   + bt_ref[...]).astype(eup_dtype))

    comb = (hx * ht).astype(jnp.bfloat16)                               # (TILE,128)
    out_ref[...] = (jnp.dot(comb, w_out_ref[...],
                            preferred_element_type=jnp.float32)
                    + b_out_ref[...]).astype(out_ref.dtype)             # (TILE,128)


# --------------------------------------------------------------------------
# Parameters (PyTorch-default Linear init): raw form for the reference plus a
# packed / fused / generation-aware form consumed by the kernel.
# --------------------------------------------------------------------------
def make_params(key, input_dim=1, shared_units=128, output_dim=3, scale=1.0):
    half = shared_units // 2
    Bx = _init_fixed_frequency_matrix((input_dim, half), scale)     # (1, 64)
    Bt = _init_fixed_frequency_matrix((input_dim, half), scale)     # (1, 64)

    def linear(k, fan_in, fan_out):
        kw, kb = jax.random.split(k)
        bound = 1.0 / jnp.sqrt(jnp.float32(fan_in))
        w_t = jax.random.uniform(kw, (fan_in, fan_out), jnp.float32, -bound, bound)
        b = jax.random.uniform(kb, (1, fan_out), jnp.float32, -bound, bound)
        return w_t, b

    k1, k2, k3, k4 = jax.random.split(key, 4)
    WxT, bx = linear(k1, shared_units, shared_units)   # path_x: Linear(128,128)+Tanh
    WtT, bt = linear(k2, shared_units, shared_units)   # path_t: Linear(128,128)+Tanh
    WfT, bf = linear(k3, shared_units, half)           # ffn:    Linear(128,64)
    WoT, bo = linear(k4, half, output_dim)             # final:  Linear(64,3)
    return dict(Bx=Bx, Bt=Bt, WxT=WxT, bx=bx, WtT=WtT, bt=bt,
                WfT=WfT, bf=bf, WoT=WoT, bo=bo)


def pack_params(p, fuse_path=None, out_pad=128):
    """Host-side fusion / folding of the raw params into kernel operands."""
    if fuse_path is None:
        fuse_path = not _is_legacy_tpu()

    su = p["WxT"].shape[0]               # 128
    half = su // 2                       # 64
    f32 = jnp.float32
    zeros_h = jnp.zeros((1, half), f32)
    pi_2 = jnp.full((1, half), jnp.pi / 2, f32)

    # ffn + final_layer folded exactly (no nonlinearity between them),
    # zero-padded to `out_pad` lane-dense output columns.
    W_ffo = p["WfT"] @ p["WoT"]                                    # (128, 3) f32
    b_ffo = p["bf"] @ p["WoT"] + p["bo"]                           # (1, 3)  f32
    out_dim = W_ffo.shape[1]
    W_out = (jnp.zeros((su, out_pad), f32).at[:, :out_dim].set(W_ffo)
             ).astype(jnp.bfloat16)                                # (128, 128) bf16
    b_out = jnp.zeros((1, out_pad), f32).at[:, :out_dim].set(b_ffo)

    kp = dict(fuse_path=bool(fuse_path), out_dim=out_dim, W_out=W_out, b_out=b_out)

    if fuse_path:
        zB = jnp.zeros_like(p["Bx"])
        kp["Bxx"] = jnp.concatenate([p["Bx"], p["Bx"], zB, zB], axis=-1)   # (1,256)
        kp["Btt"] = jnp.concatenate([zB, zB, p["Bt"], p["Bt"]], axis=-1)   # (1,256)
        kp["phase"] = jnp.concatenate([zeros_h, pi_2, zeros_h, pi_2], axis=-1)
        z = jnp.zeros((su, su), f32)
        kp["W_path"] = jnp.concatenate(
            [jnp.concatenate([p["WxT"], z], axis=1),
             jnp.concatenate([z, p["WtT"]], axis=1)], axis=0).astype(jnp.bfloat16)
        kp["b_path"] = jnp.concatenate([p["bx"], p["bt"]], axis=-1)        # (1,256)
    else:
        kp["Bx2"] = jnp.concatenate([p["Bx"], p["Bx"]], axis=-1)           # (1,128)
        kp["Bt2"] = jnp.concatenate([p["Bt"], p["Bt"]], axis=-1)           # (1,128)
        kp["phase"] = jnp.concatenate([zeros_h, pi_2], axis=-1)            # (1,128)
        kp["WxT"] = p["WxT"].astype(jnp.bfloat16)
        kp["WtT"] = p["WtT"].astype(jnp.bfloat16)
        kp["bx"] = p["bx"]
        kp["bt"] = p["bt"]
    return kp


# --------------------------------------------------------------------------
# Wrapper
# --------------------------------------------------------------------------
def fourier_feature_nn(x, t, kp, *, eup_dtype=None, tile_max=4096):
    """x, t: (N, 1) float32.  Returns (out1, out2, out3), each (N, 1) f32."""
    N = x.shape[0]
    out_dim = kp["out_dim"]
    out_pad = kp["W_out"].shape[1]       # 128 (lane-dense output block)

    if eup_dtype is None:
        eup_dtype = jnp.bfloat16 if _bf16_eup_supported() else jnp.float32

    # Tile sizing: multiple of 16 (bf16 sublane packing), capped at ceil(N/2)
    # so large N always gives >= 2 grid blocks (v7x megacore), capped at
    # tile_max so live activations (~2.5 KiB/row) stay well under the VMEM
    # limit even on v7x's 64 MiB.
    tile = max(16, min(tile_max, _round_up(pl.cdiv(max(N, 1), 2), 16)))
    num_blocks = pl.cdiv(N, tile)
    n_pad = num_blocks * tile

    xt = jnp.concatenate([x, t], axis=-1)                    # (N, 2)
    if n_pad != N:
        xt = jnp.pad(xt, ((0, n_pad - N), (0, 0)))           # zero-pad tail tile

    def const_spec(arr):
        # Weights / constants: one full block, resident across all grid steps.
        return pl.BlockSpec(arr.shape, lambda i: (0, 0))

    if kp["fuse_path"]:
        kernel = functools.partial(_fused_kernel, eup_dtype=eup_dtype)
        consts = (kp["Bxx"], kp["Btt"], kp["phase"],
                  kp["W_path"], kp["b_path"], kp["W_out"], kp["b_out"])
        flops_per_row = 2 * (256 * 256 + 128 * out_pad)
    else:
        kernel = functools.partial(_split_kernel, eup_dtype=eup_dtype)
        consts = (kp["Bx2"], kp["Bt2"], kp["phase"],
                  kp["WxT"], kp["bx"], kp["WtT"], kp["bt"],
                  kp["W_out"], kp["b_out"])
        flops_per_row = 2 * (2 * 128 * 128 + 128 * out_pad)

    cost = pl.CostEstimate(
        flops=int(n_pad * flops_per_row),
        transcendentals=int(n_pad * 512),                    # 256 sin + 256 tanh
        bytes_accessed=int(n_pad * (2 * 4 + out_pad * 2)
                           + sum(int(c.size) * c.dtype.itemsize for c in consts)),
    )

    out = pl.pallas_call(
        kernel,
        out_shape=jax.ShapeDtypeStruct((n_pad, out_pad), jnp.bfloat16),
        grid=(num_blocks,),
        in_specs=[pl.BlockSpec((tile, 2), lambda i: (i, 0))]   # packed [x|t]
                 + [const_spec(c) for c in consts],
        out_specs=pl.BlockSpec((tile, out_pad), lambda i: (i, 0)),
        compiler_params=pltpu.CompilerParams(
            # TODO(synk): if "parallel" does not shard across v7x's 2 TCs,
            # switch to pltpu.CORE_PARALLEL / core_map.
            dimension_semantics=("parallel",),
            vmem_limit_bytes=48 * 1024 * 1024),
        cost_estimate=cost,
    )(xt, *consts)

    out = out[:N, :out_dim].astype(jnp.float32)
    # split(1, dim=-1) -> three (N, 1) outputs (glue only).
    return out[:, 0:1], out[:, 1:2], out[:, 2:3]


# --------------------------------------------------------------------------
# Pure-JAX reference (original module semantics, f32 throughout)
# --------------------------------------------------------------------------
def _reference(x, t, p):
    def ff(v, B):
        vt = v @ B
        return jnp.concatenate([jnp.sin(vt), jnp.cos(vt)], axis=-1)
    hx = jnp.tanh(ff(x, p["Bx"]) @ p["WxT"] + p["bx"])
    ht = jnp.tanh(ff(t, p["Bt"]) @ p["WtT"] + p["bt"])
    f = (hx * ht) @ p["WfT"] + p["bf"]
    o = f @ p["WoT"] + p["bo"]
    return o[:, 0:1], o[:, 1:2], o[:, 2:3]


if __name__ == "__main__":
    key = jax.random.PRNGKey(0)
    kx, kt, kparam, kx2, kt2 = jax.random.split(key, 5)

    raw = make_params(kparam)
    eup = jnp.bfloat16 if _bf16_eup_supported() else jnp.float32
    # bf16 MXU operands / bf16 output (+ bf16 EUP where available) vs. the f32
    # reference => loosened tolerance; slightly looser when sin/tanh are bf16.
    TOL = (dict(atol=3e-2, rtol=3e-2) if eup == jnp.bfloat16
           else dict(atol=2e-2, rtol=2e-2))

    packed_fused = pack_params(raw, fuse_path=True)    # v6e/v7x structure
    packed_split = pack_params(raw, fuse_path=False)   # v5e-and-older structure

    # --- small test (single grid step, fused path) ---
    N = 8
    x = jax.random.uniform(kx, (N, 1), jnp.float32, -1.0, 1.0)
    t = jax.random.uniform(kt, (N, 1), jnp.float32, 0.0, 1.0)
    r1, r2, r3 = _reference(x, t, raw)
    o1, o2, o3 = fourier_feature_nn(x, t, packed_fused, eup_dtype=eup)
    jax.block_until_ready((o1, o2, o3))
    assert o1.shape == (N, 1) and o2.shape == (N, 1) and o3.shape == (N, 1)
    for a, b in ((o1, r1), (o2, r2), (o3, r3)):
        assert jnp.allclose(a, b, **TOL)

    # --- multi-step grid + tail padding, both generation-aware variants ---
    N2 = 200
    x2 = jax.random.uniform(kx2, (N2, 1), jnp.float32, -1.0, 1.0)
    t2 = jax.random.uniform(kt2, (N2, 1), jnp.float32, 0.0, 1.0)
    q1, q2, q3 = _reference(x2, t2, raw)
    for kp in (packed_fused, packed_split):
        p1, p2, p3 = fourier_feature_nn(x2, t2, kp, eup_dtype=eup, tile_max=64)
        jax.block_until_ready((p1, p2, p3))
        assert p1.shape == (N2, 1) and p2.shape == (N2, 1) and p3.shape == (N2, 1)
        for a, b in ((p1, q1), (p2, q2), (p3, q3)):
            assert jnp.allclose(a, b, **TOL)

    print("KERNEL_OK")
</pallas_src>

<mosaic_0001>
module attributes {stable_mosaic.version = 11 : i64} {
  func.func @probe(%arg0: memref<16x256xbf16, #tpu.memory_space<vmem>>, %arg1: memref<16x256xbf16, #tpu.memory_space<vmem>>) attributes {dimension_semantics = [], scalar_prefetch = 0 : i64, scratch_operands = 0 : i64, tpu.core_type = #tpu.core_type<tc>} {
    %c0 = arith.constant 0 : index
    %c0_0 = arith.constant 0 : index
    %0 = vector.load %arg0[%c0, %c0_0] : memref<16x256xbf16, #tpu.memory_space<vmem>>, vector<16x256xbf16>
    %1 = math.sin %0 : vector<16x256xbf16>
    %2 = math.tanh %1 : vector<16x256xbf16>
    %c0_1 = arith.constant 0 : index
    %c0_2 = arith.constant 0 : index
    %3 = vector.load %arg1[%c0_1, %c0_2] : memref<16x256xbf16, #tpu.memory_space<vmem>>, vector<16x256xbf16>
    tpu.vector_store %arg1[%c0_1, %c0_2], %2 {strides = array<i32>} : memref<16x256xbf16, #tpu.memory_space<vmem>>, vector<16x256xbf16>,
    return
  }
}

module attributes {stable_mosaic.version = 11 : i64} {
  func.func @_fused_kernel(%arg0: i32, %arg1: memref<16x2xf32, #tpu.memory_space<vmem>>, %arg2: memref<1x256xf32, #tpu.memory_space<vmem>>, %arg3: memref<1x256xf32, #tpu.memory_space<vmem>>, %arg4: memref<1x256xf32, #tpu.memory_space<vmem>>, %arg5: memref<256x256xbf16, #tpu.memory_space<vmem>>, %arg6: memref<1x256xf32, #tpu.memory_space<vmem>>, %arg7: memref<128x128xbf16, #tpu.memory_space<vmem>>, %arg8: memref<1x128xf32, #tpu.memory_space<vmem>>, %arg9: memref<16x128xbf16, #tpu.memory_space<vmem>>) attributes {dimension_semantics = [#tpu.dimension_semantics<parallel>], iteration_bounds = array<i64: 1>, scalar_prefetch = 0 : i64, scratch_operands = 0 : i64, tpu.core_type = #tpu.core_type<tc>, window_params = [{transform_indices = @transform_0, window_bounds = array<i64: 16, 2>}, {pipeline_mode = #tpu.pipeline_mode<synchronous>, transform_indices = @transform_1, window_bounds = array<i64: 1, 256>}, {pipeline_mode = #tpu.pipeline_mode<synchronous>, transform_indices = @transform_2, window_bounds = array<i64: 1, 256>}, {pipeline_mode = #tpu.pipeline_mode<synchronous>, transform_indices = @transform_3, window_bounds = array<i64: 1, 256>}, {pipeline_mode = #tpu.pipeline_mode<synchronous>, transform_indices = @transform_4, window_bounds = array<i64: 256, 256>}, {pipeline_mode = #tpu.pipeline_mode<synchronous>, transform_indices = @transform_5, window_bounds = array<i64: 1, 256>}, {pipeline_mode = #tpu.pipeline_mode<synchronous>, transform_indices = @transform_6, window_bounds = array<i64: 128, 128>}, {pipeline_mode = #tpu.pipeline_mode<synchronous>, transform_indices = @transform_7, window_bounds = array<i64: 1, 128>}, {transform_indices = @transform_8, window_bounds = array<i64: 16, 128>}]} {
    %c0 = arith.constant 0 : index
    %c0_0 = arith.constant 0 : index
    %0 = vector.load %arg1[%c0, %c0_0] : memref<16x2xf32, #tpu.memory_space<vmem>>, vector<16x2xf32>
    %1 = vector.extract_strided_slice %0 {offsets = [0, 0], sizes = [16, 1], strides = [1, 1]} : vector<16x2xf32> to vector<16x1xf32>
    %2 = vector.extract_strided_slice %0 {offsets = [0, 1], sizes = [16, 1], strides = [1, 1]} : vector<16x2xf32> to vector<16x1xf32>
    %c0_1 = arith.constant 0 : index
    %c0_2 = arith.constant 0 : index
    %3 = vector.load %arg2[%c0_1, %c0_2] : memref<1x256xf32, #tpu.memory_space<vmem>>, vector<1x256xf32>
    %4 = vector.broadcast %1 : vector<16x1xf32> to vector<16x256xf32>
    %5 = vector.broadcast %3 : vector<1x256xf32> to vector<16x256xf32>
    %6 = arith.mulf %4, %5 : vector<16x256xf32>
    %c0_3 = arith.constant 0 : index
    %c0_4 = arith.constant 0 : index
    %7 = vector.load %arg3[%c0_3, %c0_4] : memref<1x256xf32, #tpu.memory_space<vmem>>, vector<1x256xf32>
    %8 = vector.broadcast %2 : vector<16x1xf32> to vector<16x256xf32>
    %9 = vector.broadcast %7 : vector<1x256xf32> to vector<16x256xf32>
    %10 = arith.mulf %8, %9 : vector<16x256xf32>
    %11 = arith.addf %6, %10 : vector<16x256xf32>
    %c0_5 = arith.constant 0 : index
    %c0_6 = arith.constant 0 : index
    %12 = vector.load %arg4[%c0_5, %c0_6] : memref<1x256xf32, #tpu.memory_space<vmem>>, vector<1x256xf32>
    %13 = vector.broadcast %12 : vector<1x256xf32> to vector<16x256xf32>
    %14 = arith.addf %11, %13 : vector<16x256xf32>
    %15 = math.sin %14 : vector<16x256xf32>
    %16 = arith.truncf %15 : vector<16x256xf32> to vector<16x256xbf16>
    %c0_7 = arith.constant 0 : index
    %c0_8 = arith.constant 0 : index
    %17 = vector.load %arg5[%c0_7, %c0_8] : memref<256x256xbf16, #tpu.memory_space<vmem>>, vector<256x256xbf16>
    %cst = arith.constant dense<0.000000e+00> : vector<16x256xf32>
    %18 = tpu.matmul %16, %17, %cst {dimension_numbers = #tpu.dot_dimension_numbers<[1], [0], [0], [1], [0, 0, 1, 1], [], []>} : vector<16x256xbf16>, vector<256x256xbf16>, vector<16x256xf32> -> vector<16x256xf32>
    %c0_9 = arith.constant 0 : index
    %c0_10 = arith.constant 0 : index
    %19 = vector.load %arg6[%c0_9, %c0_10] : memref<1x256xf32, #tpu.memory_space<vmem>>, vector<1x256xf32>
    %20 = vector.broadcast %19 : vector<1x256xf32> to vector<16x256xf32>
    %21 = arith.addf %18, %20 : vector<16x256xf32>
    %22 = math.tanh %21 : vector<16x256xf32>
    %23 = vector.extract_strided_slice %22 {offsets = [0, 0], sizes = [16, 128], strides = [1, 1]} : vector<16x256xf32> to vector<16x128xf32>
    %24 = vector.extract_strided_slice %22 {offsets = [0, 128], sizes = [16, 128], strides = [1, 1]} : vector<16x256xf32> to vector<16x128xf32>
    %25 = arith.mulf %23, %24 : vector<16x128xf32>
    %26 = arith.truncf %25 : vector<16x128xf32> to vector<16x128xbf16>
    %c0_11 = arith.constant 0 : index
    %c0_12 = arith.constant 0 : index
    %27 = vector.load %arg7[%c0_11, %c0_12] : memref<128x128xbf16, #tpu.memory_space<vmem>>, vector<128x128xbf16>
    %cst_13 = arith.constant dense<0.000000e+00> : vector<16x128xf32>
    %28 = tpu.matmul %26, %27, %cst_13 {dimension_numbers = #tpu.dot_dimension_numbers<[1], [0], [0], [1], [0, 0, 1, 1], [], []>} : vector<16x128xbf16>, vector<128x128xbf16>, vector<16x128xf32> -> vector<16x128xf32>
    %c0_14 = arith.constant 0 : index
    %c0_15 = arith.constant 0 : index
    %29 = vector.load %arg8[%c0_14, %c0_15] : memref<1x128xf32, #tpu.memory_space<vmem>>, vector<1x128xf32>
    %30 = vector.broadcast %29 : vector<1x128xf32> to vector<16x128xf32>
    %31 = arith.addf %28, %30 : vector<16x128xf32>
    %32 = arith.truncf %31 : vector<16x128xf32> to vector<16x128xbf16>
    %c0_16 = arith.constant 0 : index
    %c0_17 = arith.constant 0 : index
    %33 = vector.load %arg9[%c0_16, %c0_17] : memref<16x128xbf16, #tpu.memory_space<vmem>>, vector<16x128xbf16>
    tpu.vector_store %arg9[%c0_16, %c0_17], %32 {strides = array<i32>} : memref<16x128xbf16, #tpu.memory_space<vmem>>, vector<16x128xbf16>,
    return
  }
  func.func @transform_0(%arg0: i32) -> (i32, i32) {
    %c0_i32 = arith.constant 0 : i32
    %c0_i32_0 = arith.constant 0 : i32
    return %arg0, %c0_i32 : i32, i32
  }
  func.func @transform_1(%arg0: i32) -> (i32, i32) {
    %c0_i32 = arith.constant 0 : i32
    %c0_i32_0 = arith.constant 0 : i32
    %c0_i32_1 = arith.constant 0 : i32
    return %c0_i32, %c0_i32_0 : i32, i32
  }
  func.func @transform_2(%arg0: i32) -> (i32, i32) {
    %c0_i32 = arith.constant 0 : i32
    %c0_i32_0 = arith.constant 0 : i32
    %c0_i32_1 = arith.constant 0 : i32
    return %c0_i32, %c0_i32_0 : i32, i32
  }
  func.func @transform_3(%arg0: i32) -> (i32, i32) {
    %c0_i32 = arith.constant 0 : i32
    %c0_i32_0 = arith.constant 0 : i32
    %c0_i32_1 = arith.constant 0 : i32
    return %c0_i32, %c0_i32_0 : i32, i32
  }
  func.func @transform_4(%arg0: i32) -> (i32, i32) {
    %c0_i32 = arith.constant 0 : i32
    %c0_i32_0 = arith.constant 0 : i32
    %c0_i32_1 = arith.constant 0 : i32
    return %c0_i32, %c0_i32_0 : i32, i32
  }
  func.func @transform_5(%arg0: i32) -> (i32, i32) {
    %c0_i32 = arith.constant 0 : i32
    %c0_i32_0 = arith.constant 0 : i32
    %c0_i32_1 = arith.constant 0 : i32
    return %c0_i32, %c0_i32_0 : i32, i32
  }
  func.func @transform_6(%arg0: i32) -> (i32, i32) {
    %c0_i32 = arith.constant 0 : i32
    %c0_i32_0 = arith.constant 0 : i32
    %c0_i32_1 = arith.constant 0 : i32
    return %c0_i32, %c0_i32_0 : i32, i32
  }
  func.func @transform_7(%arg0: i32) -> (i32, i32) {
    %c0_i32 = arith.constant 0 : i32
    %c0_i32_0 = arith.constant 0 : i32
    %c0_i32_1 = arith.constant 0 : i32
    return %c0_i32, %c0_i32_0 : i32, i32
  }
  func.func @transform_8(%arg0: i32) -> (i32, i32) {
    %c0_i32 = arith.constant 0 : i32
    %c0_i32_0 = arith.constant 0 : i32
    return %arg0, %c0_i32 : i32, i32
  }
}

</mosaic_0001>

<llo_original>
// kernel: tpu_custom_call.1
$region0: #{tpu_custom_call.1}
  #allocation0 [shape = 'u32[]', space=smem, size = 0x4, offset = 0x4, fixed_abs, tag = 'smem constant byte address 0x4 - core index']
  #allocation1 [shape = 'u32[72,128]{1,0:T(1,128)}', space=vmem, size = 0x9000, scoped, tag = 'internal scratch']
  %s0 = inlined_call_operand.hbm [shape: bf16[16,256], index: 0, kind: input, shape index: {}]
  %s1 = inlined_call_operand.hbm [shape: bf16[16,256], index: 1, kind: output, shape index: {}]
  %s2 = sld [smem:[#allocation0]]
  $region18: #{tpu_custom_call.1} parent=0
    _
  %s4 = ssub.s32 1, %s2
  %s5 = scalar_select 0, %s4, %s2
  $region1: #{tpu_custom_call.1} parent=0
    #allocation2 [shape = 'u8[8192]{0}', space=vmem, size = 0x2000, scoped, tag = 'input window, operand 0, single buffered']
    #allocation3 [shape = 's32[1]{0}', space=sflag, size = 0x4, scoped, tag = 'scoped memory for tpu_custom_call.1']
    #allocation4 [shape = 's32[1]{0}', space=sflag, size = 0x4, scoped, tag = 'scoped memory for tpu_custom_call.1']
    #allocation5 [shape = 'u8[8192]{0}', space=vmem, size = 0x2000, scoped, tag = 'output window, operand 0, single buffered']
    %6 = vsyncpa [#allocation3], 0
    %7 = vsyncpa [#allocation4], 0
    // Predicated region
    $region2: #{tpu_custom_call.1} parent=1 // pred_check
      _
    $region3: #{tpu_custom_call.1} parent=1 // pred_check_branch
      %9 = sbr.rel (0) target = $region5
    $region4: #{tpu_custom_call.1} parent=1 // pred_region
      %11 = vsyncadd [#allocation3], 0
      %s12 = sshll.u32 %s0, 4
      %s13 = int_to_ptr.hbm [resolvable:$true] %s12
      %s14 = sshll.u32 [#allocation2], 4
      %s15 = int_to_ptr.vmem [resolvable:$true] %s14
      %20 = dma.hbm_to_vmem [thread:$0]  %s13, 256, %s15, [#allocation3], 128, 128, 8
    $region5: #{tpu_custom_call.1} parent=1 // pred_fallthru
      _
    // Predicated region
    $region6: #{tpu_custom_call.1} parent=1 // pred_check
      _
    $region7: #{tpu_custom_call.1} parent=1 // pred_check_branch
      %22 = sbr.rel (0) target = $region9
    $region8: #{tpu_custom_call.1} parent=1 // pred_region
      %24 = dma.done [#allocation3], 256
    $region9: #{tpu_custom_call.1} parent=1 // pred_fallthru
      _
    %v25 = vld [vmem:[#allocation2] sm:$0xff]
    %v26 = vld [vmem:[#allocation2 + $0x8] sm:$0xff]
    %v27 = vunpack.i.l.bf16 %v25
    %v29 = vunpack.i.h.bf16 %v25
    %v31 = vand.u32 2147483647, %v27
    %vm32 = vcmp.le.f32.partialorder %v31, 0.7853982
    %vm33 = vcmp.lt.s32.totalorder %v27, 0
    %v34 = vand.u32 %v27, 2139095040
    %v35 = vshrl.u32 %v34, 23
    %v36 = vsub.s32 %v35, 127
    %v37 = vand.u32 2147483647, %v27
    %v38 = vand.u32 %v37, 8388607
    %v39 = vor.u32 %v38, 8388608
    %v40 = vsub.s32 0, %v39
    %v41 = vadd.s32 %v36, 1
    %vm42 = vcmp.gt.s32.totalorder %v41, 0
    %v43 = vsel %vm42, %v41, 0
    %v44 = vshrl.u32 %v43, 5
    %v45 = vand.u32 %v43, 31
    %v46 = vsub.s32 32, %v45
    %v47 = vshrl.u32 683565275, %v46
    %v48 = vshll.u32 683565275, %v45
    %v49 = vshrl.u32 2475754826, %v46
    %v50 = vor.u32 %v48, %v49
    %v51 = vshll.u32 2475754826, %v45
    %v52 = vshrl.u32 2131351028, %v46
    %v53 = vor.u32 %v51, %v52
    %v54 = vshll.u32 2131351028, %v45
    %v55 = vshrl.u32 2102212464, %v46
    %v56 = vor.u32 %v54, %v55
    %v57 = vshll.u32 2102212464, %v45
    %v58 = vshrl.u32 920167782, %v46
    %v59 = vor.u32 %v57, %v58
    %v60 = vshll.u32 920167782, %v45
    %v61 = vshrl.u32 1326507024, %v46
    %v62 = vor.u32 %v60, %v61
    %vm63 = vcmp.lt.s32.totalorder %v44, 1
    %vm64 = vcmp.lt.s32.totalorder %v44, 2
    %vm65 = vcmp.lt.s32.totalorder %v44, 3
    %vm66 = vcmp.lt.s32.totalorder %v44, 4
    %v67 = vsel %vm63, %v47, %v50
    %v68 = vsel %vm66, %v56, 2102212464
    %v69 = vsel %vm65, %v53, %v68
    %v70 = vsel %vm64, %v67, %v69
    %v71 = vsel %vm63, %v50, %v53
    %v72 = vsel %vm66, %v59, 920167782
    %v73 = vsel %vm65, %v56, %v72
    %v74 = vsel %vm64, %v71, %v73
    %v75 = vsel %vm63, %v53, %v56
    %v76 = vsel %vm66, %v62, 1326507024
    %v77 = vsel %vm65, %v59, %v76
    %v78 = vsel %vm64, %v75, %v77
    %v79 = vshll.u32 %v39, 8
    %v80 = vand.u32 %v79, 65535
    %v81 = vshrl.u32 %v79, 16
    %v82 = vand.u32 %v78, 65535
    %v83 = vshrl.u32 %v78, 16
    %v84 = vmul.u32 %v80, %v82
    %v85 = vmul.u32 %v80, %v83
    %v86 = vmul.u32 %v81, %v82
    %v87 = vmul.u32 %v81, %v83
    %v88 = vshll.u32 %v85, 16
    %v89 = vshrl.u32 %v85, 16
    %v90 = vshll.u32 %v86, 16
    %v91 = vshrl.u32 %v86, 16
    %vm92 = vc.u32 %v84, %v88
    %v93 = vsel %vm92, 1, 0
    %v94 = vadd.s32 %v84, %v88
    %v95 = vadd.s32 %v87, %v93
    %vm96 = vc.u32 %v94, %v90
    %v97 = vsel %vm96, 1, 0
    %v98 = vadd.s32 %v94, %v90
    %v99 = vadd.s32 %v95, %v97
    %v100 = vadd.s32 %v99, %v89
    %v101 = vadd.s32 %v100, %v91
    %v102 = vand.u32 %v79, 65535
    %v103 = vshrl.u32 %v79, 16
    %v104 = vand.u32 %v74, 65535
    %v105 = vshrl.u32 %v74, 16
    %v106 = vmul.u32 %v102, %v104
    %v107 = vmul.u32 %v102, %v105
    %v108 = vmul.u32 %v103, %v104
    %v109 = vmul.u32 %v103, %v105
    %v110 = vshll.u32 %v107, 16
    %v111 = vshrl.u32 %v107, 16
    %v112 = vshll.u32 %v108, 16
    %v113 = vshrl.u32 %v108, 16
    %vm114 = vc.u32 %v106, %v110
    %v115 = vsel %vm114, 1, 0
    %v116 = vadd.s32 %v106, %v110
    %v117 = vadd.s32 %v109, %v115
    %vm118 = vc.u32 %v116, %v112
    %v119 = vsel %vm118, 1, 0
    %v120 = vadd.s32 %v116, %v112
    %v121 = vadd.s32 %v117, %v119
    %v122 = vadd.s32 %v121, %v111
    %v123 = vadd.s32 %v122, %v113
    %v124 = vmul.u32 %v79, %v70
    %v125 = vadd.s32 %v101, %v120
    %vm126 = vc.u32 %v101, %v120
    %v127 = vadd.s32 %v123, 1
    %v128 = vsel %vm126, %v127, %v123
    %v129 = vadd.s32 %v124, %v128
    %v130 = vadd.s32 %v129, 536870912
    %v131 = vshrl.u32 %v130, 30
    %v132 = vshll.u32 %v131, 30
    %v133 = vsub.s32 %v129, %v132
    %vm134 = vcmp.lt.s32.totalorder %v133, 0
    %v135 = vsub.s32 0, %v133
    %v136 = vsel %vm134, %v135, %v133
    %v137 = vclz %v136
    %v138 = vsub.s32 %v137, 2
    %vm139 = vcmp.gt.s32.totalorder 0, %v138
    %v140 = vsel %vm139, 0, %v138
    %v141 = vsub.s32 32, %v140
    %v142 = vshll.u32 %v133, %v140
    %v143 = vshrl.u32 %v125, %v141
    %v144 = vor.u32 %v142, %v143
    %v145 = vsub.s32 4294967266, %v140
    %v146 = vadd.s32 %v145, 127
    %v147 = vshll.u32 %v146, 23
    %v148 = vor.u32 4788187, %v147
    %v149 = vand.u32 2147483647, %v148
    %v151 = vcvt.s32.f32 %v144
    %v152 = vmul.f32 %v151, %v149
    %v153 = vxor.u32 %v152, 2147483648
    %v154 = vsel %vm33, %v153, %v152
    %v155 = vsub.s32 4, %v131
    %v156 = vsel %vm33, %v155, %v131
    %v157 = vsel %vm32, %v27, %v154
    %v158 = vsel %vm32, 0, %v156
    %v159 = vand.u32 2147483647, %v29
    %vm160 = vcmp.le.f32.partialorder %v159, 0.7853982
    %vm161 = vcmp.lt.s32.totalorder %v29, 0
    %v162 = vand.u32 %v29, 2139095040
    %v163 = vshrl.u32 %v162, 23
    %v164 = vsub.s32 %v163, 127
    %v165 = vand.u32 2147483647, %v29
    %v166 = vand.u32 %v165, 8388607
    %v167 = vor.u32 %v166, 8388608
    %v168 = vsub.s32 0, %v167
    %v169 = vadd.s32 %v164, 1
    %vm170 = vcmp.gt.s32.totalorder %v169, 0
    %v171 = vsel %vm170, %v169, 0
    %v172 = vshrl.u32 %v171, 5
    %v173 = vand.u32 %v171, 31
    %v174 = vsub.s32 32, %v173
    %v175 = vshrl.u32 683565275, %v174
    %v176 = vshll.u32 683565275, %v173
    %v177 = vshrl.u32 2475754826, %v174
    %v178 = vor.u32 %v176, %v177
    %v179 = vshll.u32 2475754826, %v173
    %v180 = vshrl.u32 2131351028, %v174
    %v181 = vor.u32 %v179, %v180
    %v182 = vshll.u32 2131351028, %v173
    %v183 = vshrl.u32 2102212464, %v174
    %v184 = vor.u32 %v182, %v183
    %v185 = vshll.u32 2102212464, %v173
    %v186 = vshrl.u32 920167782, %v174
    %v187 = vor.u32 %v185, %v186
    %v188 = vshll.u32 920167782, %v173
    %v189 = vshrl.u32 1326507024, %v174
    %v190 = vor.u32 %v188, %v189
    %vm191 = vcmp.lt.s32.totalorder %v172, 1
    %vm192 = vcmp.lt.s32.totalorder %v172, 2
    %vm193 = vcmp.lt.s32.totalorder %v172, 3
    %vm194 = vcmp.lt.s32.totalorder %v172, 4
    %v195 = vsel %vm191, %v175, %v178
    %v196 = vsel %vm194, %v184, 2102212464
    %v197 = vsel %vm193, %v181, %v196
    %v198 = vsel %vm192, %v195, %v197
    %v199 = vsel %vm191, %v178, %v181
    %v200 = vsel %vm194, %v187, 920167782
    %v201 = vsel %vm193, %v184, %v200
    %v202 = vsel %vm192, %v199, %v201
    %v203 = vsel %vm191, %v181, %v184
    %v204 = vsel %vm194, %v190, 1326507024
    %v205 = vsel %vm193, %v187, %v204
    %v206 = vsel %vm192, %v203, %v205
    %v207 = vshll.u32 %v167, 8
    %v208 = vand.u32 %v207, 65535
    %v209 = vshrl.u32 %v207, 16
    %v210 = vand.u32 %v206, 65535
    %v211 = vshrl.u32 %v206, 16
    %v212 = vmul.u32 %v208, %v210
    %v213 = vmul.u32 %v208, %v211
    %v214 = vmul.u32 %v209, %v210
    %v215 = vmul.u32 %v209, %v211
    %v216 = vshll.u32 %v213, 16
    %v217 = vshrl.u32 %v213, 16
    %v218 = vshll.u32 %v214, 16
    %v219 = vshrl.u32 %v214, 16
    %vm220 = vc.u32 %v212, %v216
    %v221 = vsel %vm220, 1, 0
    %v222 = vadd.s32 %v212, %v216
    %v223 = vadd.s32 %v215, %v221
    %vm224 = vc.u32 %v222, %v218
    %v225 = vsel %vm224, 1, 0
    %v226 = vadd.s32 %v222, %v218
    %v227 = vadd.s32 %v223, %v225
    %v228 = vadd.s32 %v227, %v217
    %v229 = vadd.s32 %v228, %v219
    %v230 = vand.u32 %v207, 65535
    %v231 = vshrl.u32 %v207, 16
    %v232 = vand.u32 %v202, 65535
    %v233 = vshrl.u32 %v202, 16
    %v234 = vmul.u32 %v230, %v232
    %v235 = vmul.u32 %v230, %v233
    %v236 = vmul.u32 %v231, %v232
    %v237 = vmul.u32 %v231, %v233
    %v238 = vshll.u32 %v235, 16
    %v239 = vshrl.u32 %v235, 16
    %v240 = vshll.u32 %v236, 16
    %v241 = vshrl.u32 %v236, 16
    %vm242 = vc.u32 %v234, %v238
    %v243 = vsel %vm242, 1, 0
    %v244 = vadd.s32 %v234, %v238
    %v245 = vadd.s32 %v237, %v243
    %vm246 = vc.u32 %v244, %v240
    %v247 = vsel %vm246, 1, 0
    %v248 = vadd.s32 %v244, %v240
    %v249 = vadd.s32 %v245, %v247
    %v250 = vadd.s32 %v249, %v239
    %v251 = vadd.s32 %v250, %v241
    %v252 = vmul.u32 %v207, %v198
    %v253 = vadd.s32 %v229, %v248
    %vm254 = vc.u32 %v229, %v248
    %v255 = vadd.s32 %v251, 1
    %v256 = vsel %vm254, %v255, %v251
    %v257 = vadd.s32 %v252, %v256
    %v258 = vadd.s32 %v257, 536870912
    %v259 = vshrl.u32 %v258, 30
    %v260 = vshll.u32 %v259, 30
    %v261 = vsub.s32 %v257, %v260
    %vm262 = vcmp.lt.s32.totalorder %v261, 0
    %v263 = vsub.s32 0, %v261
    %v264 = vsel %vm262, %v263, %v261
    %v265 = vclz %v264
    %v266 = vsub.s32 %v265, 2
    %vm267 = vcmp.gt.s32.totalorder 0, %v266
    %v268 = vsel %vm267, 0, %v266
    %v269 = vsub.s32 32, %v268
    %v270 = vshll.u32 %v261, %v268
    %v271 = vshrl.u32 %v253, %v269
    %v272 = vor.u32 %v270, %v271
    %v273 = vsub.s32 4294967266, %v268
    %v274 = vadd.s32 %v273, 127
    %v275 = vshll.u32 %v274, 23
    %v276 = vor.u32 4788187, %v275
    %v277 = vand.u32 2147483647, %v276
    %v279 = vcvt.s32.f32 %v272
    %v280 = vmul.f32 %v279, %v277
    %v281 = vxor.u32 %v280, 2147483648
    %v282 = vsel %vm161, %v281, %v280
    %v283 = vsub.s32 4, %v259
    %v284 = vsel %vm161, %v283, %v259
    %v285 = vsel %vm160, %v29, %v282
    %v286 = vsel %vm160, 0, %v284
    %v287 = vmul.f32 %v157, %v157
    %v288 = vmul.f32 %v287, -0.001358992
    %v289 = vadd.f32 %v288, 0.041655596
    %v290 = vmul.f32 %v287, %v289
    %v291 = vadd.f32 %v290, -0.4999988
    %v292 = vmul.f32 %v287, %v291
    %v293 = vadd.f32 1.0, %v292
    %v294 = vmul.f32 %v285, %v285
    %v295 = vmul.f32 %v294, -0.001358992
    %v296 = vadd.f32 %v295, 0.041655596
    %v297 = vmul.f32 %v294, %v296
    %v298 = vadd.f32 %v297, -0.4999988
    %v299 = vmul.f32 %v294, %v298
    %v300 = vadd.f32 1.0, %v299
    %v301 = vmul.f32 %v157, %v157
    %v302 = vmul.f32 %v301, -0.00019511016
    %v303 = vadd.f32 %v302, 0.008332121
    %v304 = vmul.f32 %v301, %v303
    %v305 = vadd.f32 %v304, -0.16666654
    %v306 = vmul.f32 %v301, %v305
    %v307 = vadd.f32 %v306, 1.0
    %v308 = vmul.f32 %v307, %v157
    %v309 = vmul.f32 %v285, %v285
    %v310 = vmul.f32 %v309, -0.00019511016
    %v311 = vadd.f32 %v310, 0.008332121
    %v312 = vmul.f32 %v309, %v311
    %v313 = vadd.f32 %v312, -0.16666654
    %v314 = vmul.f32 %v309, %v313
    %v315 = vadd.f32 %v314, 1.0
    %v316 = vmul.f32 %v315, %v285
    %vm317 = vweird.f32 %v27
    %vm318 = vweird.f32 %v29
    %v319 = vadd.s32 %v158, 3
    %v320 = vand.u32 %v319, 3
    %vm321 = vcmp.lt.s32.totalorder %v320, 2
    %vm322 = vcmp.eq.s32.totalorder %v320, 0
    %v323 = vxor.u32 %v308, 2147483648
    %v324 = vsel %vm322, %v293, %v323
    %vm325 = vcmp.eq.s32.totalorder %v320, 2
    %v326 = vxor.u32 %v293, 2147483648
    %v327 = vsel %vm325, %v326, %v308
    %v328 = vsel %vm321, %v324, %v327
    %v329 = vsel %vm317, nan, %v328
    %v330 = vadd.s32 %v286, 3
    %v331 = vand.u32 %v330, 3
    %vm332 = vcmp.lt.s32.totalorder %v331, 2
    %vm333 = vcmp.eq.s32.totalorder %v331, 0
    %v334 = vxor.u32 %v316, 2147483648
    %v335 = vsel %vm333, %v300, %v334
    %vm336 = vcmp.eq.s32.totalorder %v331, 2
    %v337 = vxor.u32 %v300, 2147483648
    %v338 = vsel %vm336, %v337, %v316
    %v339 = vsel %vm332, %v335, %v338
    %v340 = vsel %vm318, nan, %v339
    %v341 = vpack.i.bf16 %v340, %v329
    %v342 = vunpack.i.l.bf16 %v26
    %v344 = vunpack.i.h.bf16 %v26
    %v346 = vand.u32 2147483647, %v342
    %vm347 = vcmp.le.f32.partialorder %v346, 0.7853982
    %vm348 = vcmp.lt.s32.totalorder %v342, 0
    %v349 = vand.u32 %v342, 2139095040
    %v350 = vshrl.u32 %v349, 23
    %v351 = vsub.s32 %v350, 127
    %v352 = vand.u32 2147483647, %v342
    %v353 = vand.u32 %v352, 8388607
    %v354 = vor.u32 %v353, 8388608
    %v355 = vsub.s32 0, %v354
    %v356 = vadd.s32 %v351, 1
    %vm357 = vcmp.gt.s32.totalorder %v356, 0
    %v358 = vsel %vm357, %v356, 0
    %v359 = vshrl.u32 %v358, 5
    %v360 = vand.u32 %v358, 31
    %v361 = vsub.s32 32, %v360
    %v362 = vshrl.u32 683565275, %v361
    %v363 = vshll.u32 683565275, %v360
    %v364 = vshrl.u32 2475754826, %v361
    %v365 = vor.u32 %v363, %v364
    %v366 = vshll.u32 2475754826, %v360
    %v367 = vshrl.u32 2131351028, %v361
    %v368 = vor.u32 %v366, %v367
    %v369 = vshll.u32 2131351028, %v360
    %v370 = vshrl.u32 2102212464, %v361
    %v371 = vor.u32 %v369, %v370
    %v372 = vshll.u32 2102212464, %v360
    %v373 = vshrl.u32 920167782, %v361
    %v374 = vor.u32 %v372, %v373
    %v375 = vshll.u32 920167782, %v360
    %v376 = vshrl.u32 1326507024, %v361
    %v377 = vor.u32 %v375, %v376
    %vm378 = vcmp.lt.s32.totalorder %v359, 1
    %vm379 = vcmp.lt.s32.totalorder %v359, 2
    %vm380 = vcmp.lt.s32.totalorder %v359, 3
    %vm381 = vcmp.lt.s32.totalorder %v359, 4
    %v382 = vsel %vm378, %v362, %v365
    %v383 = vsel %vm381, %v371, 2102212464
    %v384 = vsel %vm380, %v368, %v383
    %v385 = vsel %vm379, %v382, %v384
    %v386 = vsel %vm378, %v365, %v368
    %v387 = vsel %vm381, %v374, 920167782
    %v388 = vsel %vm380, %v371, %v387
    %v389 = vsel %vm379, %v386, %v388
    %v390 = vsel %vm378, %v368, %v371
    %v391 = vsel %vm381, %v377, 1326507024
    %v392 = vsel %vm380, %v374, %v391
    %v393 = vsel %vm379, %v390, %v392
    %v394 = vshll.u32 %v354, 8
    %v395 = vand.u32 %v394, 65535
    %v396 = vshrl.u32 %v394, 16
    %v397 = vand.u32 %v393, 65535
    %v398 = vshrl.u32 %v393, 16
    %v399 = vmul.u32 %v395, %v397
    %v400 = vmul.u32 %v395, %v398
    %v401 = vmul.u32 %v396, %v397
    %v402 = vmul.u32 %v396, %v398
    %v403 = vshll.u32 %v400, 16
    %v404 = vshrl.u32 %v400, 16
    %v405 = vshll.u32 %v401, 16
    %v406 = vshrl.u32 %v401, 16
    %vm407 = vc.u32 %v399, %v403
    %v408 = vsel %vm407, 1, 0
    %v409 = vadd.s32 %v399, %v403
    %v410 = vadd.s32 %v402, %v408
    %vm411 = vc.u32 %v409, %v405
    %v412 = vsel %vm411, 1, 0
    %v413 = vadd.s32 %v409, %v405
    %v414 = vadd.s32 %v410, %v412
    %v415 = vadd.s32 %v414, %v404
    %v416 = vadd.s32 %v415, %v406
    %v417 = vand.u32 %v394, 65535
    %v418 = vshrl.u32 %v394, 16
    %v419 = vand.u32 %v389, 65535
    %v420 = vshrl.u32 %v389, 16
    %v421 = vmul.u32 %v417, %v419
    %v422 = vmul.u32 %v417, %v420
    %v423 = vmul.u32 %v418, %v419
    %v424 = vmul.u32 %v418, %v420
    %v425 = vshll.u32 %v422, 16
    %v426 = vshrl.u32 %v422, 16
    %v427 = vshll.u32 %v423, 16
    %v428 = vshrl.u32 %v423, 16
    %vm429 = vc.u32 %v421, %v425
    %v430 = vsel %vm429, 1, 0
    %v431 = vadd.s32 %v421, %v425
    %v432 = vadd.s32 %v424, %v430
    %vm433 = vc.u32 %v431, %v427
    %v434 = vsel %vm433, 1, 0
    %v435 = vadd.s32 %v431, %v427
    %v436 = vadd.s32 %v432, %v434
    %v437 = vadd.s32 %v436, %v426
    %v438 = vadd.s32 %v437, %v428
    %v439 = vmul.u32 %v394, %v385
    %v440 = vadd.s32 %v416, %v435
    %vm441 = vc.u32 %v416, %v435
    %v442 = vadd.s32 %v438, 1
    %v443 = vsel %vm441, %v442, %v438
    %v444 = vadd.s32 %v439, %v443
    %v445 = vadd.s32 %v444, 536870912
    %v446 = vshrl.u32 %v445, 30
    %v447 = vshll.u32 %v446, 30
    %v448 = vsub.s32 %v444, %v447
    %vm449 = vcmp.lt.s32.totalorder %v448, 0
    %v450 = vsub.s32 0, %v448
    %v451 = vsel %vm449, %v450, %v448
    %v452 = vclz %v451
    %v453 = vsub.s32 %v452, 2
    %vm454 = vcmp.gt.s32.totalorder 0, %v453
    %v455 = vsel %vm454, 0, %v453
    %v456 = vsub.s32 32, %v455
    %v457 = vshll.u32 %v448, %v455
    %v458 = vshrl.u32 %v440, %v456
    %v459 = vor.u32 %v457, %v458
    %v460 = vsub.s32 4294967266, %v455
    %v461 = vadd.s32 %v460, 127
    %v462 = vshll.u32 %v461, 23
    %v463 = vor.u32 4788187, %v462
    %v464 = vand.u32 2147483647, %v463
    %v466 = vcvt.s32.f32 %v459
    %v467 = vmul.f32 %v466, %v464
    %v468 = vxor.u32 %v467, 2147483648
    %v469 = vsel %vm348, %v468, %v467
    %v470 = vsub.s32 4, %v446
    %v471 = vsel %vm348, %v470, %v446
    %v472 = vsel %vm347, %v342, %v469
    %v473 = vsel %vm347, 0, %v471
    %v474 = vand.u32 2147483647, %v344
    %vm475 = vcmp.le.f32.partialorder %v474, 0.7853982
    %vm476 = vcmp.lt.s32.totalorder %v344, 0
    %v477 = vand.u32 %v344, 2139095040
    %v478 = vshrl.u32 %v477, 23
    %v479 = vsub.s32 %v478, 127
    %v480 = vand.u32 2147483647, %v344
    %v481 = vand.u32 %v480, 8388607
    %v482 = vor.u32 %v481, 8388608
    %v483 = vsub.s32 0, %v482
    %v484 = vadd.s32 %v479, 1
    %vm485 = vcmp.gt.s32.totalorder %v484, 0
    %v486 = vsel %vm485, %v484, 0
    %v487 = vshrl.u32 %v486, 5
    %v488 = vand.u32 %v486, 31
    %v489 = vsub.s32 32, %v488
    %v490 = vshrl.u32 683565275, %v489
    %v491 = vshll.u32 683565275, %v488
    %v492 = vshrl.u32 2475754826, %v489
    %v493 = vor.u32 %v491, %v492
    %v494 = vshll.u32 2475754826, %v488
    %v495 = vshrl.u32 2131351028, %v489
    %v496 = vor.u32 %v494, %v495
    %v497 = vshll.u32 2131351028, %v488
    %v498 = vshrl.u32 2102212464, %v489
    %v499 = vor.u32 %v497, %v498
    %v500 = vshll.u32 2102212464, %v488
    %v501 = vshrl.u32 920167782, %v489
    %v502 = vor.u32 %v500, %v501
    %v503 = vshll.u32 920167782, %v488
    %v504 = vshrl.u32 1326507024, %v489
    %v505 = vor.u32 %v503, %v504
    %vm506 = vcmp.lt.s32.totalorder %v487, 1
    %vm507 = vcmp.lt.s32.totalorder %v487, 2
    %vm508 = vcmp.lt.s32.totalorder %v487, 3
    %vm509 = vcmp.lt.s32.totalorder %v487, 4
    %v510 = vsel %vm506, %v490, %v493
    %v511 = vsel %vm509, %v499, 2102212464
    %v512 = vsel %vm508, %v496, %v511
    %v513 = vsel %vm507, %v510, %v512
    %v514 = vsel %vm506, %v493, %v496
    %v515 = vsel %vm509, %v502, 920167782
    %v516 = vsel %vm508, %v499, %v515
    %v517 = vsel %vm507, %v514, %v516
    %v518 = vsel %vm506, %v496, %v499
    %v519 = vsel %vm509, %v505, 1326507024
    %v520 = vsel %vm508, %v502, %v519
    %v521 = vsel %vm507, %v518, %v520
    %v522 = vshll.u32 %v482, 8
    %v523 = vand.u32 %v522, 65535
    %v524 = vshrl.u32 %v522, 16
    %v525 = vand.u32 %v521, 65535
    %v526 = vshrl.u32 %v521, 16
    %v527 = vmul.u32 %v523, %v525
    %v528 = vmul.u32 %v523, %v526
    %v529 = vmul.u32 %v524, %v525
    %v530 = vmul.u32 %v524, %v526
    %v531 = vshll.u32 %v528, 16
    %v532 = vshrl.u32 %v528, 16
    %v533 = vshll.u32 %v529, 16
    %v534 = vshrl.u32 %v529, 16
    %vm535 = vc.u32 %v527, %v531
    %v536 = vsel %vm535, 1, 0
    %v537 = vadd.s32 %v527, %v531
    %v538 = vadd.s32 %v530, %v536
    %vm539 = vc.u32 %v537, %v533
    %v540 = vsel %vm539, 1, 0
    %v541 = vadd.s32 %v537, %v533
    %v542 = vadd.s32 %v538, %v540
    %v543 = vadd.s32 %v542, %v532
    %v544 = vadd.s32 %v543, %v534
    %v545 = vand.u32 %v522, 65535
    %v546 = vshrl.u32 %v522, 16
    %v547 = vand.u32 %v517, 65535
    %v548 = vshrl.u32 %v517, 16
    %v549 = vmul.u32 %v545, %v547
    %v550 = vmul.u32 %v545, %v548
    %v551 = vmul.u32 %v546, %v547
    %v552 = vmul.u32 %v546, %v548
    %v553 = vshll.u32 %v550, 16
    %v554 = vshrl.u32 %v550, 16
    %v555 = vshll.u32 %v551, 16
    %v556 = vshrl.u32 %v551, 16
    %vm557 = vc.u32 %v549, %v553
    %v558 = vsel %vm557, 1, 0
    %v559 = vadd.s32 %v549, %v553
    %v560 = vadd.s32 %v552, %v558
    %vm561 = vc.u32 %v559, %v555
    %v562 = vsel %vm561, 1, 0
    %v563 = vadd.s32 %v559, %v555
    %v564 = vadd.s32 %v560, %v562
    %v565 = vadd.s32 %v564, %v554
    %v566 = vadd.s32 %v565, %v556
    %v567 = vmul.u32 %v522, %v513
    %v568 = vadd.s32 %v544, %v563
    %vm569 = vc.u32 %v544, %v563
    %v570 = vadd.s32 %v566, 1
    %v571 = vsel %vm569, %v570, %v566
    %v572 = vadd.s32 %v567, %v571
    %v573 = vadd.s32 %v572, 536870912
    %v574 = vshrl.u32 %v573, 30
    %v575 = vshll.u32 %v574, 30
    %v576 = vsub.s32 %v572, %v575
    %vm577 = vcmp.lt.s32.totalorder %v576, 0
    %v578 = vsub.s32 0, %v576
    %v579 = vsel %vm577, %v578, %v576
    %v580 = vclz %v579
    %v581 = vsub.s32 %v580, 2
    %vm582 = vcmp.gt.s32.totalorder 0, %v581
    %v583 = vsel %vm582, 0, %v581
    %v584 = vsub.s32 32, %v583
    %v585 = vshll.u32 %v576, %v583
    %v586 = vshrl.u32 %v568, %v584
    %v587 = vor.u32 %v585, %v586
    %v588 = vsub.s32 4294967266, %v583
    %v589 = vadd.s32 %v588, 127
    %v590 = vshll.u32 %v589, 23
    %v591 = vor.u32 4788187, %v590
    %v592 = vand.u32 2147483647, %v591
    %v594 = vcvt.s32.f32 %v587
    %v595 = vmul.f32 %v594, %v592
    %v596 = vxor.u32 %v595, 2147483648
    %v597 = vsel %vm476, %v596, %v595
    %v598 = vsub.s32 4, %v574
    %v599 = vsel %vm476, %v598, %v574
    %v600 = vsel %vm475, %v344, %v597
    %v601 = vsel %vm475, 0, %v599
    %v602 = vmul.f32 %v472, %v472
    %v603 = vmul.f32 %v602, -0.001358992
    %v604 = vadd.f32 %v603, 0.041655596
    %v605 = vmul.f32 %v602, %v604
    %v606 = vadd.f32 %v605, -0.4999988
    %v607 = vmul.f32 %v602, %v606
    %v608 = vadd.f32 1.0, %v607
    %v609 = vmul.f32 %v600, %v600
    %v610 = vmul.f32 %v609, -0.001358992
    %v611 = vadd.f32 %v610, 0.041655596
    %v612 = vmul.f32 %v609, %v611
    %v613 = vadd.f32 %v612, -0.4999988
    %v614 = vmul.f32 %v609, %v613
    %v615 = vadd.f32 1.0, %v614
    %v616 = vmul.f32 %v472, %v472
    %v617 = vmul.f32 %v616, -0.00019511016
    %v618 = vadd.f32 %v617, 0.008332121
    %v619 = vmul.f32 %v616, %v618
    %v620 = vadd.f32 %v619, -0.16666654
    %v621 = vmul.f32 %v616, %v620
    %v622 = vadd.f32 %v621, 1.0
    %v623 = vmul.f32 %v622, %v472
    %v624 = vmul.f32 %v600, %v600
    %v625 = vmul.f32 %v624, -0.00019511016
    %v626 = vadd.f32 %v625, 0.008332121
    %v627 = vmul.f32 %v624, %v626
    %v628 = vadd.f32 %v627, -0.16666654
    %v629 = vmul.f32 %v624, %v628
    %v630 = vadd.f32 %v629, 1.0
    %v631 = vmul.f32 %v630, %v600
    %vm632 = vweird.f32 %v342
    %vm633 = vweird.f32 %v344
    %v634 = vadd.s32 %v473, 3
    %v635 = vand.u32 %v634, 3
    %vm636 = vcmp.lt.s32.totalorder %v635, 2
    %vm637 = vcmp.eq.s32.totalorder %v635, 0
    %v638 = vxor.u32 %v623, 2147483648
    %v639 = vsel %vm637, %v608, %v638
    %vm640 = vcmp.eq.s32.totalorder %v635, 2
    %v641 = vxor.u32 %v608, 2147483648
    %v642 = vsel %vm640, %v641, %v623
    %v643 = vsel %vm636, %v639, %v642
    %v644 = vsel %vm632, nan, %v643
    %v645 = vadd.s32 %v601, 3
    %v646 = vand.u32 %v645, 3
    %vm647 = vcmp.lt.s32.totalorder %v646, 2
    %vm648 = vcmp.eq.s32.totalorder %v646, 0
    %v649 = vxor.u32 %v631, 2147483648
    %v650 = vsel %vm648, %v615, %v649
    %vm651 = vcmp.eq.s32.totalorder %v646, 2
    %v652 = vxor.u32 %v615, 2147483648
    %v653 = vsel %vm651, %v652, %v631
    %v654 = vsel %vm647, %v650, %v653
    %v655 = vsel %vm633, nan, %v654
    %v656 = vpack.i.bf16 %v655, %v644
    %v657 = vunpack.c.l.bf16 %v341
    %v658 = vunpack.c.h.bf16 %v341
    %v659 = vunpack.c.l.bf16 %v656
    %v660 = vunpack.c.h.bf16 %v656
    %v661 = vtanh.pop %v657
    %v662 = vtanh.pop %v658
    %v663 = vtanh.pop %v659
    %v664 = vtanh.pop %v660
    %v665 = vpack.c.bf16 %v662, %v661
    %v666 = vpack.c.bf16 %v664, %v663
    %667 = vst [vmem:[#allocation5] sm:$0xff] %v665
    %668 = vst [vmem:[#allocation5 + $0x8] sm:$0xff] %v666
    // Predicated region
    $region10: #{tpu_custom_call.1} parent=1 // pred_check
      _
    $region11: #{tpu_custom_call.1} parent=1 // pred_check_branch
      %670 = sbr.rel (0) target = $region13
    $region12: #{tpu_custom_call.1} parent=1 // pred_region
      %672 = vsyncadd [#allocation4], 0
      %s673 = sshll.u32 [#allocation5], 4
      %s674 = int_to_ptr.vmem [resolvable:$true] %s673
      %s675 = sshll.u32 %s1, 4
      %s676 = int_to_ptr.hbm [resolvable:$true] %s675
      %681 = dma.vmem_to_hbm [thread:$0]  %s674, 256, %s676, [#allocation4], 128, 128, 8
    $region13: #{tpu_custom_call.1} parent=1 // pred_fallthru
      _
    // Predicated region
    $region14: #{tpu_custom_call.1} parent=1 // pred_check
      _
    $region15: #{tpu_custom_call.1} parent=1 // pred_check_branch
      %683 = sbr.rel (0) target = $region17
    $region16: #{tpu_custom_call.1} parent=1 // pred_region
      %685 = dma.done [#allocation4], 256
    $region17: #{tpu_custom_call.1} parent=1 // pred_fallthru
      _
    %686 = vsyncpa [#allocation3], 1
    %687 = vsyncpa [#allocation4], 1

// kernel: tpu_custom_call.1
$region0: #{tpu_custom_call.1}
  #allocation0 [shape = 'u32[]', space=smem, size = 0x4, offset = 0x4, fixed_abs, tag = 'smem constant byte address 0x4 - core index']
  #allocation1 [shape = 'u32[72,128]{1,0:T(1,128)}', space=vmem, size = 0x9000, scoped, tag = 'internal scratch']
  %s0 = inlined_call_operand.vmem [shape: f32[16,2], index: 0, kind: input, shape index: {}]
  %s1 = inlined_call_operand.vmem [shape: f32[1,256], index: 1, kind: input, shape index: {}]
  %s2 = inlined_call_operand.vmem [shape: f32[1,256], index: 2, kind: input, shape index: {}]
  %s3 = inlined_call_operand.vmem [shape: f32[1,256], index: 3, kind: input, shape index: {}]
  %s4 = inlined_call_operand.hbm [shape: bf16[256,256], index: 4, kind: input, shape index: {}]
  %s5 = inlined_call_operand.vmem [shape: f32[1,256], index: 5, kind: input, shape index: {}]
  %s6 = inlined_call_operand.hbm [shape: bf16[128,128], index: 6, kind: input, shape index: {}]
  %s7 = inlined_call_operand.vmem [shape: f32[1,128], index: 7, kind: input, shape index: {}]
  %s8 = inlined_call_operand.hbm [shape: bf16[16,128], index: 8, kind: output, shape index: {}]
  %s9 = sld [smem:[#allocation0]]
  $region50: #{tpu_custom_call.1} parent=0
    _
  %s11 = ssub.s32 1, %s9
  %s12 = scalar_select 0, %s11, %s9
  $region1: #{tpu_custom_call.1} parent=0
    #allocation2 [shape = 'u8[131072]{0}', space=vmem, size = 0x20000, scoped, tag = 'input window, operand 4, single buffered']
    #allocation3 [shape = 's32[1]{0}', space=sflag, size = 0x4, scoped, tag = 'scoped memory for tpu_custom_call.1']
    #allocation4 [shape = 's32[1]{0}', space=sflag, size = 0x4, scoped, tag = 'scoped memory for tpu_custom_call.1']
    #allocation5 [shape = 'u8[32768]{0}', space=vmem, size = 0x8000, scoped, tag = 'input window, operand 6, single buffered']
    #allocation6 [shape = 's32[1]{0}', space=sflag, size = 0x4, scoped, tag = 'scoped memory for tpu_custom_call.1']
    #allocation7 [shape = 'u8[4096]{0}', space=vmem, size = 0x1000, scoped, tag = 'output window, operand 0, single buffered']
    %13 = vsyncpa [#allocation3], 0
    %14 = vsyncpa [#allocation6], 0
    %15 = vsyncpa [#allocation4], 0
    // Predicated region
    $region2: #{tpu_custom_call.1} parent=1 // pred_check
      _
    $region3: #{tpu_custom_call.1} parent=1 // pred_check_branch
      %17 = sbr.rel (0) target = $region5
    $region4: #{tpu_custom_call.1} parent=1 // pred_region
      _
    $region5: #{tpu_custom_call.1} parent=1 // pred_fallthru
      _
    // Predicated region
    $region6: #{tpu_custom_call.1} parent=1 // pred_check
      _
    $region7: #{tpu_custom_call.1} parent=1 // pred_check_branch
      %19 = sbr.rel (0) target = $region9
    $region8: #{tpu_custom_call.1} parent=1 // pred_region
      _
    $region9: #{tpu_custom_call.1} parent=1 // pred_fallthru
      _
    // Predicated region
    $region10: #{tpu_custom_call.1} parent=1 // pred_check
      _
    $region11: #{tpu_custom_call.1} parent=1 // pred_check_branch
      %21 = sbr.rel (0) target = $region13
    $region12: #{tpu_custom_call.1} parent=1 // pred_region
      _
    $region13: #{tpu_custom_call.1} parent=1 // pred_fallthru
      _
    // Predicated region
    $region14: #{tpu_custom_call.1} parent=1 // pred_check
      _
    $region15: #{tpu_custom_call.1} parent=1 // pred_check_branch
      %23 = sbr.rel (0) target = $region17
    $region16: #{tpu_custom_call.1} parent=1 // pred_region
      _
    $region17: #{tpu_custom_call.1} parent=1 // pred_fallthru
      _
    // Predicated region
    $region18: #{tpu_custom_call.1} parent=1 // pred_check
      _
    $region19: #{tpu_custom_call.1} parent=1 // pred_check_branch
      %25 = sbr.rel (0) target = $region21
    $region20: #{tpu_custom_call.1} parent=1 // pred_region
      %27 = vsyncadd [#allocation3], 0
      %s28 = sshll.u32 %s4, 4
      %s29 = int_to_ptr.hbm [resolvable:$true] %s28
      %s30 = sshll.u32 [#allocation2], 4
      %s31 = int_to_ptr.vmem [resolvable:$true] %s30
      %36 = dma.hbm_to_vmem [thread:$0]  %s29, 4096, %s31, [#allocation3], 128, 128, 8
    $region21: #{tpu_custom_call.1} parent=1 // pred_fallthru
      _
    // Predicated region
    $region22: #{tpu_custom_call.1} parent=1 // pred_check
      _
    $region23: #{tpu_custom_call.1} parent=1 // pred_check_branch
      %38 = sbr.rel (0) target = $region25
    $region24: #{tpu_custom_call.1} parent=1 // pred_region
      _
    $region25: #{tpu_custom_call.1} parent=1 // pred_fallthru
      _
    // Predicated region
    $region26: #{tpu_custom_call.1} parent=1 // pred_check
      _
    $region27: #{tpu_custom_call.1} parent=1 // pred_check_branch
      %40 = sbr.rel (0) target = $region29
    $region28: #{tpu_custom_call.1} parent=1 // pred_region
      %42 = vsyncadd [#allocation6], 0
      %s43 = sshll.u32 %s6, 4
      %s44 = int_to_ptr.hbm [resolvable:$true] %s43
      %s45 = sshll.u32 [#allocation5], 4
      %s46 = int_to_ptr.vmem [resolvable:$true] %s45
      %51 = dma.hbm_to_vmem [thread:$0]  %s44, 1024, %s46, [#allocation6], 64, 64, 4
    $region29: #{tpu_custom_call.1} parent=1 // pred_fallthru
      _
    // Predicated region
    $region30: #{tpu_custom_call.1} parent=1 // pred_check
      _
    $region31: #{tpu_custom_call.1} parent=1 // pred_check_branch
      %53 = sbr.rel (0) target = $region33
    $region32: #{tpu_custom_call.1} parent=1 // pred_region
      _
    $region33: #{tpu_custom_call.1} parent=1 // pred_fallthru
      _
    // Predicated region
    $region34: #{tpu_custom_call.1} parent=1 // pred_check
      _
    $region35: #{tpu_custom_call.1} parent=1 // pred_check_branch
      %55 = sbr.rel (0) target = $region37
    $region36: #{tpu_custom_call.1} parent=1 // pred_region
      %57 = dma.done [#allocation3], 4096
    $region37: #{tpu_custom_call.1} parent=1 // pred_fallthru
      _
    // Predicated region
    $region38: #{tpu_custom_call.1} parent=1 // pred_check
      _
    $region39: #{tpu_custom_call.1} parent=1 // pred_check_branch
      %59 = sbr.rel (0) target = $region41
    $region40: #{tpu_custom_call.1} parent=1 // pred_region
      %61 = dma.done [#allocation6], 1024
    $region41: #{tpu_custom_call.1} parent=1 // pred_fallthru
      _
    %v62 = vld [vmem:[%s0] sm:$0xff]
    %v63 = vld [vmem:[%s0 + $0x8] sm:$0xff]
    %v64 = vld [vmem:[%s1] sm:$0x3]
    %66 = vset.pattern.permute.xlu0 0
    %67 = vperm.xlu0 %66, %v62
    %v68 = vpop.permute.xlu0 %67
    %71 = vset.pattern.permute.xlu0 0
    %72 = vperm.xlu0 %71, %v63
    %v73 = vpop.permute.xlu0 %72
    %v76 = vperm.slane %v64, 0
    %v77 = vperm.slane %v64, 1
    %v80 = vmul.f32 %v68, %v76
    %v81 = vmul.f32 %v68, %v77
    %v82 = vmul.f32 %v73, %v76
    %v83 = vmul.f32 %v73, %v77
    %v84 = vld [vmem:[%s2] sm:$0x3]
    %85 = vset.pattern.permute.xlu0 1
    %86 = vperm.xlu0 %85, %v62
    %v87 = vpop.permute.xlu0 %86
    %89 = vset.pattern.permute.xlu0 1
    %90 = vperm.xlu0 %89, %v63
    %v91 = vpop.permute.xlu0 %90
    %v94 = vperm.slane %v84, 0
    %v95 = vperm.slane %v84, 1
    %v98 = vmul.f32 %v87, %v94
    %v99 = vmul.f32 %v87, %v95
    %v100 = vmul.f32 %v91, %v94
    %v101 = vmul.f32 %v91, %v95
    %v102 = vadd.f32 %v80, %v98
    %v103 = vadd.f32 %v81, %v99
    %v104 = vadd.f32 %v82, %v100
    %v105 = vadd.f32 %v83, %v101
    %v106 = vld [vmem:[%s3] sm:$0x3]
    %v108 = vperm.slane %v106, 0
    %v109 = vperm.slane %v106, 1
    %v112 = vadd.f32 %v102, %v108
    %v113 = vadd.f32 %v103, %v109
    %v114 = vadd.f32 %v104, %v108
    %v115 = vadd.f32 %v105, %v109
    %v116 = vand.u32 2147483647, %v112
    %vm117 = vcmp.le.f32.partialorder %v116, 0.7853982
    %vm118 = vcmp.lt.s32.totalorder %v112, 0
    %v119 = vand.u32 %v112, 2139095040
    %v120 = vshrl.u32 %v119, 23
    %v121 = vsub.s32 %v120, 127
    %v122 = vand.u32 2147483647, %v112
    %v123 = vand.u32 %v122, 8388607
    %v124 = vor.u32 %v123, 8388608
    %v125 = vsub.s32 0, %v124
    %v126 = vadd.s32 %v121, 1
    %vm127 = vcmp.gt.s32.totalorder %v126, 0
    %v128 = vsel %vm127, %v126, 0
    %v129 = vshrl.u32 %v128, 5
    %v130 = vand.u32 %v128, 31
    %v131 = vsub.s32 32, %v130
    %v132 = vshrl.u32 683565275, %v131
    %v133 = vshll.u32 683565275, %v130
    %v134 = vshrl.u32 2475754826, %v131
    %v135 = vor.u32 %v133, %v134
    %v136 = vshll.u32 2475754826, %v130
    %v137 = vshrl.u32 2131351028, %v131
    %v138 = vor.u32 %v136, %v137
    %v139 = vshll.u32 2131351028, %v130
    %v140 = vshrl.u32 2102212464, %v131
    %v141 = vor.u32 %v139, %v140
    %v142 = vshll.u32 2102212464, %v130
    %v143 = vshrl.u32 920167782, %v131
    %v144 = vor.u32 %v142, %v143
    %v145 = vshll.u32 920167782, %v130
    %v146 = vshrl.u32 1326507024, %v131
    %v147 = vor.u32 %v145, %v146
    %vm148 = vcmp.lt.s32.totalorder %v129, 1
    %vm149 = vcmp.lt.s32.totalorder %v129, 2
    %vm150 = vcmp.lt.s32.totalorder %v129, 3
    %vm151 = vcmp.lt.s32.totalorder %v129, 4
    %v152 = vsel %vm148, %v132, %v135
    %v153 = vsel %vm151, %v141, 2102212464
    %v154 = vsel %vm150, %v138, %v153
    %v155 = vsel %vm149, %v152, %v154
    %v156 = vsel %vm148, %v135, %v138
    %v157 = vsel %vm151, %v144, 920167782
    %v158 = vsel %vm150, %v141, %v157
    %v159 = vsel %vm149, %v156, %v158
    %v160 = vsel %vm148, %v138, %v141
    %v161 = vsel %vm151, %v147, 1326507024
    %v162 = vsel %vm150, %v144, %v161
    %v163 = vsel %vm149, %v160, %v162
    %v164 = vshll.u32 %v124, 8
    %v165 = vand.u32 %v164, 65535
    %v166 = vshrl.u32 %v164, 16
    %v167 = vand.u32 %v163, 65535
    %v168 = vshrl.u32 %v163, 16
    %v169 = vmul.u32 %v165, %v167
    %v170 = vmul.u32 %v165, %v168
    %v171 = vmul.u32 %v166, %v167
    %v172 = vmul.u32 %v166, %v168
    %v173 = vshll.u32 %v170, 16
    %v174 = vshrl.u32 %v170, 16
    %v175 = vshll.u32 %v171, 16
    %v176 = vshrl.u32 %v171, 16
    %vm177 = vc.u32 %v169, %v173
    %v178 = vsel %vm177, 1, 0
    %v179 = vadd.s32 %v169, %v173
    %v180 = vadd.s32 %v172, %v178
    %vm181 = vc.u32 %v179, %v175
    %v182 = vsel %vm181, 1, 0
    %v183 = vadd.s32 %v179, %v175
    %v184 = vadd.s32 %v180, %v182
    %v185 = vadd.s32 %v184, %v174
    %v186 = vadd.s32 %v185, %v176
    %v187 = vand.u32 %v164, 65535
    %v188 = vshrl.u32 %v164, 16
    %v189 = vand.u32 %v159, 65535
    %v190 = vshrl.u32 %v159, 16
    %v191 = vmul.u32 %v187, %v189
    %v192 = vmul.u32 %v187, %v190
    %v193 = vmul.u32 %v188, %v189
    %v194 = vmul.u32 %v188, %v190
    %v195 = vshll.u32 %v192, 16
    %v196 = vshrl.u32 %v192, 16
    %v197 = vshll.u32 %v193, 16
    %v198 = vshrl.u32 %v193, 16
    %vm199 = vc.u32 %v191, %v195
    %v200 = vsel %vm199, 1, 0
    %v201 = vadd.s32 %v191, %v195
    %v202 = vadd.s32 %v194, %v200
    %vm203 = vc.u32 %v201, %v197
    %v204 = vsel %vm203, 1, 0
    %v205 = vadd.s32 %v201, %v197
    %v206 = vadd.s32 %v202, %v204
    %v207 = vadd.s32 %v206, %v196
    %v208 = vadd.s32 %v207, %v198
    %v209 = vmul.u32 %v164, %v155
    %v210 = vadd.s32 %v186, %v205
    %vm211 = vc.u32 %v186, %v205
    %v212 = vadd.s32 %v208, 1
    %v213 = vsel %vm211, %v212, %v208
    %v214 = vadd.s32 %v209, %v213
    %v215 = vadd.s32 %v214, 536870912
    %v216 = vshrl.u32 %v215, 30
    %v217 = vshll.u32 %v216, 30
    %v218 = vsub.s32 %v214, %v217
    %vm219 = vcmp.lt.s32.totalorder %v218, 0
    %v220 = vsub.s32 0, %v218
    %v221 = vsel %vm219, %v220, %v218
    %v222 = vclz %v221
    %v223 = vsub.s32 %v222, 2
    %vm224 = vcmp.gt.s32.totalorder 0, %v223
    %v225 = vsel %vm224, 0, %v223
    %v226 = vsub.s32 32, %v225
    %v227 = vshll.u32 %v218, %v225
    %v228 = vshrl.u32 %v210, %v226
    %v229 = vor.u32 %v227, %v228
    %v230 = vsub.s32 4294967266, %v225
    %v231 = vadd.s32 %v230, 127
    %v232 = vshll.u32 %v231, 23
    %v233 = vor.u32 4788187, %v232
    %v234 = vand.u32 2147483647, %v233
    %v236 = vcvt.s32.f32 %v229
    %v237 = vmul.f32 %v236, %v234
    %v238 = vxor.u32 %v237, 2147483648
    %v239 = vsel %vm118, %v238, %v237
    %v240 = vsub.s32 4, %v216
    %v241 = vsel %vm118, %v240, %v216
    %v242 = vsel %vm117, %v112, %v239
    %v243 = vsel %vm117, 0, %v241
    %v244 = vmul.f32 %v242, %v242
    %v245 = vmul.f32 %v244, -0.001358992
    %v246 = vadd.f32 %v245, 0.041655596
    %v247 = vmul.f32 %v244, %v246
    %v248 = vadd.f32 %v247, -0.4999988
    %v249 = vmul.f32 %v244, %v248
    %v250 = vadd.f32 1.0, %v249
    %v251 = vmul.f32 %v242, %v242
    %v252 = vmul.f32 %v251, -0.00019511016
    %v253 = vadd.f32 %v252, 0.008332121
    %v254 = vmul.f32 %v251, %v253
    %v255 = vadd.f32 %v254, -0.16666654
    %v256 = vmul.f32 %v251, %v255
    %v257 = vadd.f32 %v256, 1.0
    %v258 = vmul.f32 %v257, %v242
    %vm259 = vweird.f32 %v112
    %v260 = vadd.s32 %v243, 3
    %v261 = vand.u32 %v260, 3
    %vm262 = vcmp.lt.s32.totalorder %v261, 2
    %vm263 = vcmp.eq.s32.totalorder %v261, 0
    %v264 = vxor.u32 %v258, 2147483648
    %v265 = vsel %vm263, %v250, %v264
    %vm266 = vcmp.eq.s32.totalorder %v261, 2
    %v267 = vxor.u32 %v250, 2147483648
    %v268 = vsel %vm266, %v267, %v258
    %v269 = vsel %vm262, %v265, %v268
    %v270 = vsel %vm259, nan, %v269
    %v271 = vand.u32 2147483647, %v113
    %vm272 = vcmp.le.f32.partialorder %v271, 0.7853982
    %vm273 = vcmp.lt.s32.totalorder %v113, 0
    %v274 = vand.u32 %v113, 2139095040
    %v275 = vshrl.u32 %v274, 23
    %v276 = vsub.s32 %v275, 127
    %v277 = vand.u32 2147483647, %v113
    %v278 = vand.u32 %v277, 8388607
    %v279 = vor.u32 %v278, 8388608
    %v280 = vsub.s32 0, %v279
    %v281 = vadd.s32 %v276, 1
    %vm282 = vcmp.gt.s32.totalorder %v281, 0
    %v283 = vsel %vm282, %v281, 0
    %v284 = vshrl.u32 %v283, 5
    %v285 = vand.u32 %v283, 31
    %v286 = vsub.s32 32, %v285
    %v287 = vshrl.u32 683565275, %v286
    %v288 = vshll.u32 683565275, %v285
    %v289 = vshrl.u32 2475754826, %v286
    %v290 = vor.u32 %v288, %v289
    %v291 = vshll.u32 2475754826, %v285
    %v292 = vshrl.u32 2131351028, %v286
    %v293 = vor.u32 %v291, %v292
    %v294 = vshll.u32 2131351028, %v285
    %v295 = vshrl.u32 2102212464, %v286
    %v296 = vor.u32 %v294, %v295
    %v297 = vshll.u32 2102212464, %v285
    %v298 = vshrl.u32 920167782, %v286
    %v299 = vor.u32 %v297, %v298
    %v300 = vshll.u32 920167782, %v285
    %v301 = vshrl.u32 1326507024, %v286
    %v302 = vor.u32 %v300, %v301
    %vm303 = vcmp.lt.s32.totalorder %v284, 1
    %vm304 = vcmp.lt.s32.totalorder %v284, 2
    %vm305 = vcmp.lt.s32.totalorder %v284, 3
    %vm306 = vcmp.lt.s32.totalorder %v284, 4
    %v307 = vsel %vm303, %v287, %v290
    %v308 = vsel %vm306, %v296, 2102212464
    %v309 = vsel %vm305, %v293, %v308
    %v310 = vsel %vm304, %v307, %v309
    %v311 = vsel %vm303, %v290, %v293
    %v312 = vsel %vm306, %v299, 920167782
    %v313 = vsel %vm305, %v296, %v312
    %v314 = vsel %vm304, %v311, %v313
    %v315 = vsel %vm303, %v293, %v296
    %v316 = vsel %vm306, %v302, 1326507024
    %v317 = vsel %vm305, %v299, %v316
    %v318 = vsel %vm304, %v315, %v317
    %v319 = vshll.u32 %v279, 8
    %v320 = vand.u32 %v319, 65535
    %v321 = vshrl.u32 %v319, 16
    %v322 = vand.u32 %v318, 65535
    %v323 = vshrl.u32 %v318, 16
    %v324 = vmul.u32 %v320, %v322
    %v325 = vmul.u32 %v320, %v323
    %v326 = vmul.u32 %v321, %v322
    %v327 = vmul.u32 %v321, %v323
    %v328 = vshll.u32 %v325, 16
    %v329 = vshrl.u32 %v325, 16
    %v330 = vshll.u32 %v326, 16
    %v331 = vshrl.u32 %v326, 16
    %vm332 = vc.u32 %v324, %v328
    %v333 = vsel %vm332, 1, 0
    %v334 = vadd.s32 %v324, %v328
    %v335 = vadd.s32 %v327, %v333
    %vm336 = vc.u32 %v334, %v330
    %v337 = vsel %vm336, 1, 0
    %v338 = vadd.s32 %v334, %v330
    %v339 = vadd.s32 %v335, %v337
    %v340 = vadd.s32 %v339, %v329
    %v341 = vadd.s32 %v340, %v331
    %v342 = vand.u32 %v319, 65535
    %v343 = vshrl.u32 %v319, 16
    %v344 = vand.u32 %v314, 65535
    %v345 = vshrl.u32 %v314, 16
    %v346 = vmul.u32 %v342, %v344
    %v347 = vmul.u32 %v342, %v345
    %v348 = vmul.u32 %v343, %v344
    %v349 = vmul.u32 %v343, %v345
    %v350 = vshll.u32 %v347, 16
    %v351 = vshrl.u32 %v347, 16
    %v352 = vshll.u32 %v348, 16
    %v353 = vshrl.u32 %v348, 16
    %vm354 = vc.u32 %v346, %v350
    %v355 = vsel %vm354, 1, 0
    %v356 = vadd.s32 %v346, %v350
    %v357 = vadd.s32 %v349, %v355
    %vm358 = vc.u32 %v356, %v352
    %v359 = vsel %vm358, 1, 0
    %v360 = vadd.s32 %v356, %v352
    %v361 = vadd.s32 %v357, %v359
    %v362 = vadd.s32 %v361, %v351
    %v363 = vadd.s32 %v362, %v353
    %v364 = vmul.u32 %v319, %v310
    %v365 = vadd.s32 %v341, %v360
    %vm366 = vc.u32 %v341, %v360
    %v367 = vadd.s32 %v363, 1
    %v368 = vsel %vm366, %v367, %v363
    %v369 = vadd.s32 %v364, %v368
    %v370 = vadd.s32 %v369, 536870912
    %v371 = vshrl.u32 %v370, 30
    %v372 = vshll.u32 %v371, 30
    %v373 = vsub.s32 %v369, %v372
    %vm374 = vcmp.lt.s32.totalorder %v373, 0
    %v375 = vsub.s32 0, %v373
    %v376 = vsel %vm374, %v375, %v373
    %v377 = vclz %v376
    %v378 = vsub.s32 %v377, 2
    %vm379 = vcmp.gt.s32.totalorder 0, %v378
    %v380 = vsel %vm379, 0, %v378
    %v381 = vsub.s32 32, %v380
    %v382 = vshll.u32 %v373, %v380
    %v383 = vshrl.u32 %v365, %v381
    %v384 = vor.u32 %v382, %v383
    %v385 = vsub.s32 4294967266, %v380
    %v386 = vadd.s32 %v385, 127
    %v387 = vshll.u32 %v386, 23
    %v388 = vor.u32 4788187, %v387
    %v389 = vand.u32 2147483647, %v388
    %v391 = vcvt.s32.f32 %v384
    %v392 = vmul.f32 %v391, %v389
    %v393 = vxor.u32 %v392, 2147483648
    %v394 = vsel %vm273, %v393, %v392
    %v395 = vsub.s32 4, %v371
    %v396 = vsel %vm273, %v395, %v371
    %v397 = vsel %vm272, %v113, %v394
    %v398 = vsel %vm272, 0, %v396
    %v399 = vmul.f32 %v397, %v397
    %v400 = vmul.f32 %v399, -0.001358992
    %v401 = vadd.f32 %v400, 0.041655596
    %v402 = vmul.f32 %v399, %v401
    %v403 = vadd.f32 %v402, -0.4999988
    %v404 = vmul.f32 %v399, %v403
    %v405 = vadd.f32 1.0, %v404
    %v406 = vmul.f32 %v397, %v397
    %v407 = vmul.f32 %v406, -0.00019511016
    %v408 = vadd.f32 %v407, 0.008332121
    %v409 = vmul.f32 %v406, %v408
    %v410 = vadd.f32 %v409, -0.16666654
    %v411 = vmul.f32 %v406, %v410
    %v412 = vadd.f32 %v411, 1.0
    %v413 = vmul.f32 %v412, %v397
    %vm414 = vweird.f32 %v113
    %v415 = vadd.s32 %v398, 3
    %v416 = vand.u32 %v415, 3
    %vm417 = vcmp.lt.s32.totalorder %v416, 2
    %vm418 = vcmp.eq.s32.totalorder %v416, 0
    %v419 = vxor.u32 %v413, 2147483648
    %v420 = vsel %vm418, %v405, %v419
    %vm421 = vcmp.eq.s32.totalorder %v416, 2
    %v422 = vxor.u32 %v405, 2147483648
    %v423 = vsel %vm421, %v422, %v413
    %v424 = vsel %vm417, %v420, %v423
    %v425 = vsel %vm414, nan, %v424
    %v426 = vand.u32 2147483647, %v114
    %vm427 = vcmp.le.f32.partialorder %v426, 0.7853982
    %vm428 = vcmp.lt.s32.totalorder %v114, 0
    %v429 = vand.u32 %v114, 2139095040
    %v430 = vshrl.u32 %v429, 23
    %v431 = vsub.s32 %v430, 127
    %v432 = vand.u32 2147483647, %v114
    %v433 = vand.u32 %v432, 8388607
    %v434 = vor.u32 %v433, 8388608
    %v435 = vsub.s32 0, %v434
    %v436 = vadd.s32 %v431, 1
    %vm437 = vcmp.gt.s32.totalorder %v436, 0
    %v438 = vsel %vm437, %v436, 0
    %v439 = vshrl.u32 %v438, 5
    %v440 = vand.u32 %v438, 31
    %v441 = vsub.s32 32, %v440
    %v442 = vshrl.u32 683565275, %v441
    %v443 = vshll.u32 683565275, %v440
    %v444 = vshrl.u32 2475754826, %v441
    %v445 = vor.u32 %v443, %v444
    %v446 = vshll.u32 2475754826, %v440
    %v447 = vshrl.u32 2131351028, %v441
    %v448 = vor.u32 %v446, %v447
    %v449 = vshll.u32 2131351028, %v440
    %v450 = vshrl.u32 2102212464, %v441
    %v451 = vor.u32 %v449, %v450
    %v452 = vshll.u32 2102212464, %v440
    %v453 = vshrl.u32 920167782, %v441
    %v454 = vor.u32 %v452, %v453
    %v455 = vshll.u32 920167782, %v440
    %v456 = vshrl.u32 1326507024, %v441
    %v457 = vor.u32 %v455, %v456
    %vm458 = vcmp.lt.s32.totalorder %v439, 1
    %vm459 = vcmp.lt.s32.totalorder %v439, 2
    %vm460 = vcmp.lt.s32.totalorder %v439, 3
    %vm461 = vcmp.lt.s32.totalorder %v439, 4
    %v462 = vsel %vm458, %v442, %v445
    %v463 = vsel %vm461, %v451, 2102212464
    %v464 = vsel %vm460, %v448, %v463
    %v465 = vsel %vm459, %v462, %v464
    %v466 = vsel %vm458, %v445, %v448
    %v467 = vsel %vm461, %v454, 920167782
    %v468 = vsel %vm460, %v451, %v467
    %v469 = vsel %vm459, %v466, %v468
    %v470 = vsel %vm458, %v448, %v451
    %v471 = vsel %vm461, %v457, 1326507024
    %v472 = vsel %vm460, %v454, %v471
    %v473 = vsel %vm459, %v470, %v472
    %v474 = vshll.u32 %v434, 8
    %v475 = vand.u32 %v474, 65535
    %v476 = vshrl.u32 %v474, 16
    %v477 = vand.u32 %v473, 65535
    %v478 = vshrl.u32 %v473, 16
    %v479 = vmul.u32 %v475, %v477
    %v480 = vmul.u32 %v475, %v478
    %v481 = vmul.u32 %v476, %v477
    %v482 = vmul.u32 %v476, %v478
    %v483 = vshll.u32 %v480, 16
    %v484 = vshrl.u32 %v480, 16
    %v485 = vshll.u32 %v481, 16
    %v486 = vshrl.u32 %v481, 16
    %vm487 = vc.u32 %v479, %v483
    %v488 = vsel %vm487, 1, 0
    %v489 = vadd.s32 %v479, %v483
    %v490 = vadd.s32 %v482, %v488
    %vm491 = vc.u32 %v489, %v485
    %v492 = vsel %vm491, 1, 0
    %v493 = vadd.s32 %v489, %v485
    %v494 = vadd.s32 %v490, %v492
    %v495 = vadd.s32 %v494, %v484
    %v496 = vadd.s32 %v495, %v486
    %v497 = vand.u32 %v474, 65535
    %v498 = vshrl.u32 %v474, 16
    %v499 = vand.u32 %v469, 65535
    %v500 = vshrl.u32 %v469, 16
    %v501 = vmul.u32 %v497, %v499
    %v502 = vmul.u32 %v497, %v500
    %v503 = vmul.u32 %v498, %v499
    %v504 = vmul.u32 %v498, %v500
    %v505 = vshll.u32 %v502, 16
    %v506 = vshrl.u32 %v502, 16
    %v507 = vshll.u32 %v503, 16
    %v508 = vshrl.u32 %v503, 16
    %vm509 = vc.u32 %v501, %v505
    %v510 = vsel %vm509, 1, 0
    %v511 = vadd.s32 %v501, %v505
    %v512 = vadd.s32 %v504, %v510
    %vm513 = vc.u32 %v511, %v507
    %v514 = vsel %vm513, 1, 0
    %v515 = vadd.s32 %v511, %v507
    %v516 = vadd.s32 %v512, %v514
    %v517 = vadd.s32 %v516, %v506
    %v518 = vadd.s32 %v517, %v508
    %v519 = vmul.u32 %v474, %v465
    %v520 = vadd.s32 %v496, %v515
    %vm521 = vc.u32 %v496, %v515
    %v522 = vadd.s32 %v518, 1
    %v523 = vsel %vm521, %v522, %v518
    %v524 = vadd.s32 %v519, %v523
    %v525 = vadd.s32 %v524, 536870912
    %v526 = vshrl.u32 %v525, 30
    %v527 = vshll.u32 %v526, 30
    %v528 = vsub.s32 %v524, %v527
    %vm529 = vcmp.lt.s32.totalorder %v528, 0
    %v530 = vsub.s32 0, %v528
    %v531 = vsel %vm529, %v530, %v528
    %v532 = vclz %v531
    %v533 = vsub.s32 %v532, 2
    %vm534 = vcmp.gt.s32.totalorder 0, %v533
    %v535 = vsel %vm534, 0, %v533
    %v536 = vsub.s32 32, %v535
    %v537 = vshll.u32 %v528, %v535
    %v538 = vshrl.u32 %v520, %v536
    %v539 = vor.u32 %v537, %v538
    %v540 = vsub.s32 4294967266, %v535
    %v541 = vadd.s32 %v540, 127
    %v542 = vshll.u32 %v541, 23
    %v543 = vor.u32 4788187, %v542
    %v544 = vand.u32 2147483647, %v543
    %v546 = vcvt.s32.f32 %v539
    %v547 = vmul.f32 %v546, %v544
    %v548 = vxor.u32 %v547, 2147483648
    %v549 = vsel %vm428, %v548, %v547
    %v550 = vsub.s32 4, %v526
    %v551 = vsel %vm428, %v550, %v526
    %v552 = vsel %vm427, %v114, %v549
    %v553 = vsel %vm427, 0, %v551
    %v554 = vmul.f32 %v552, %v552
    %v555 = vmul.f32 %v554, -0.001358992
    %v556 = vadd.f32 %v555, 0.041655596
    %v557 = vmul.f32 %v554, %v556
    %v558 = vadd.f32 %v557, -0.4999988
    %v559 = vmul.f32 %v554, %v558
    %v560 = vadd.f32 1.0, %v559
    %v561 = vmul.f32 %v552, %v552
    %v562 = vmul.f32 %v561, -0.00019511016
    %v563 = vadd.f32 %v562, 0.008332121
    %v564 = vmul.f32 %v561, %v563
    %v565 = vadd.f32 %v564, -0.16666654
    %v566 = vmul.f32 %v561, %v565
    %v567 = vadd.f32 %v566, 1.0
    %v568 = vmul.f32 %v567, %v552
    %vm569 = vweird.f32 %v114
    %v570 = vadd.s32 %v553, 3
    %v571 = vand.u32 %v570, 3
    %vm572 = vcmp.lt.s32.totalorder %v571, 2
    %vm573 = vcmp.eq.s32.totalorder %v571, 0
    %v574 = vxor.u32 %v568, 2147483648
    %v575 = vsel %vm573, %v560, %v574
    %vm576 = vcmp.eq.s32.totalorder %v571, 2
    %v577 = vxor.u32 %v560, 2147483648
    %v578 = vsel %vm576, %v577, %v568
    %v579 = vsel %vm572, %v575, %v578
    %v580 = vsel %vm569, nan, %v579
    %v581 = vand.u32 2147483647, %v115
    %vm582 = vcmp.le.f32.partialorder %v581, 0.7853982
    %vm583 = vcmp.lt.s32.totalorder %v115, 0
    %v584 = vand.u32 %v115, 2139095040
    %v585 = vshrl.u32 %v584, 23
    %v586 = vsub.s32 %v585, 127
    %v587 = vand.u32 2147483647, %v115
    %v588 = vand.u32 %v587, 8388607
    %v589 = vor.u32 %v588, 8388608
    %v590 = vsub.s32 0, %v589
    %v591 = vadd.s32 %v586, 1
    %vm592 = vcmp.gt.s32.totalorder %v591, 0
    %v593 = vsel %vm592, %v591, 0
    %v594 = vshrl.u32 %v593, 5
    %v595 = vand.u32 %v593, 31
    %v596 = vsub.s32 32, %v595
    %v597 = vshrl.u32 683565275, %v596
    %v598 = vshll.u32 683565275, %v595
    %v599 = vshrl.u32 2475754826, %v596
    %v600 = vor.u32 %v598, %v599
    %v601 = vshll.u32 2475754826, %v595
    %v602 = vshrl.u32 2131351028, %v596
    %v603 = vor.u32 %v601, %v602
    %v604 = vshll.u32 2131351028, %v595
    %v605 = vshrl.u32 2102212464, %v596
    %v606 = vor.u32 %v604, %v605
    %v607 = vshll.u32 2102212464, %v595
    %v608 = vshrl.u32 920167782, %v596
    %v609 = vor.u32 %v607, %v608
    %v610 = vshll.u32 920167782, %v595
    %v611 = vshrl.u32 1326507024, %v596
    %v612 = vor.u32 %v610, %v611
    %vm613 = vcmp.lt.s32.totalorder %v594, 1
    %vm614 = vcmp.lt.s32.totalorder %v594, 2
    %vm615 = vcmp.lt.s32.totalorder %v594, 3
    %vm616 = vcmp.lt.s32.totalorder %v594, 4
    %v617 = vsel %vm613, %v597, %v600
    %v618 = vsel %vm616, %v606, 2102212464
    %v619 = vsel %vm615, %v603, %v618
    %v620 = vsel %vm614, %v617, %v619
    %v621 = vsel %vm613, %v600, %v603
    %v622 = vsel %vm616, %v609, 920167782
    %v623 = vsel %vm615, %v606, %v622
    %v624 = vsel %vm614, %v621, %v623
    %v625 = vsel %vm613, %v603, %v606
    %v626 = vsel %vm616, %v612, 1326507024
    %v627 = vsel %vm615, %v609, %v626
    %v628 = vsel %vm614, %v625, %v627
    %v629 = vshll.u32 %v589, 8
    %v630 = vand.u32 %v629, 65535
    %v631 = vshrl.u32 %v629, 16
    %v632 = vand.u32 %v628, 65535
    %v633 = vshrl.u32 %v628, 16
    %v634 = vmul.u32 %v630, %v632
    %v635 = vmul.u32 %v630, %v633
    %v636 = vmul.u32 %v631, %v632
    %v637 = vmul.u32 %v631, %v633
    %v638 = vshll.u32 %v635, 16
    %v639 = vshrl.u32 %v635, 16
    %v640 = vshll.u32 %v636, 16
    %v641 = vshrl.u32 %v636, 16
    %vm642 = vc.u32 %v634, %v638
    %v643 = vsel %vm642, 1, 0
    %v644 = vadd.s32 %v634, %v638
    %v645 = vadd.s32 %v637, %v643
    %vm646 = vc.u32 %v644, %v640
    %v647 = vsel %vm646, 1, 0
    %v648 = vadd.s32 %v644, %v640
    %v649 = vadd.s32 %v645, %v647
    %v650 = vadd.s32 %v649, %v639
    %v651 = vadd.s32 %v650, %v641
    %v652 = vand.u32 %v629, 65535
    %v653 = vshrl.u32 %v629, 16
    %v654 = vand.u32 %v624, 65535
    %v655 = vshrl.u32 %v624, 16
    %v656 = vmul.u32 %v652, %v654
    %v657 = vmul.u32 %v652, %v655
    %v658 = vmul.u32 %v653, %v654
    %v659 = vmul.u32 %v653, %v655
    %v660 = vshll.u32 %v657, 16
    %v661 = vshrl.u32 %v657, 16
    %v662 = vshll.u32 %v658, 16
    %v663 = vshrl.u32 %v658, 16
    %vm664 = vc.u32 %v656, %v660
    %v665 = vsel %vm664, 1, 0
    %v666 = vadd.s32 %v656, %v660
    %v667 = vadd.s32 %v659, %v665
    %vm668 = vc.u32 %v666, %v662
    %v669 = vsel %vm668, 1, 0
    %v670 = vadd.s32 %v666, %v662
    %v671 = vadd.s32 %v667, %v669
    %v672 = vadd.s32 %v671, %v661
    %v673 = vadd.s32 %v672, %v663
    %v674 = vmul.u32 %v629, %v620
    %v675 = vadd.s32 %v651, %v670
    %vm676 = vc.u32 %v651, %v670
    %v677 = vadd.s32 %v673, 1
    %v678 = vsel %vm676, %v677, %v673
    %v679 = vadd.s32 %v674, %v678
    %v680 = vadd.s32 %v679, 536870912
    %v681 = vshrl.u32 %v680, 30
    %v682 = vshll.u32 %v681, 30
    %v683 = vsub.s32 %v679, %v682
    %vm684 = vcmp.lt.s32.totalorder %v683, 0
    %v685 = vsub.s32 0, %v683
    %v686 = vsel %vm684, %v685, %v683
    %v687 = vclz %v686
    %v688 = vsub.s32 %v687, 2
    %vm689 = vcmp.gt.s32.totalorder 0, %v688
    %v690 = vsel %vm689, 0, %v688
    %v691 = vsub.s32 32, %v690
    %v692 = vshll.u32 %v683, %v690
    %v693 = vshrl.u32 %v675, %v691
    %v694 = vor.u32 %v692, %v693
    %v695 = vsub.s32 4294967266, %v690
    %v696 = vadd.s32 %v695, 127
    %v697 = vshll.u32 %v696, 23
    %v698 = vor.u32 4788187, %v697
    %v699 = vand.u32 2147483647, %v698
    %v701 = vcvt.s32.f32 %v694
    %v702 = vmul.f32 %v701, %v699
    %v703 = vxor.u32 %v702, 2147483648
    %v704 = vsel %vm583, %v703, %v702
    %v705 = vsub.s32 4, %v681
    %v706 = vsel %vm583, %v705, %v681
    %v707 = vsel %vm582, %v115, %v704
    %v708 = vsel %vm582, 0, %v706
    %v709 = vmul.f32 %v707, %v707
    %v710 = vmul.f32 %v709, -0.001358992
    %v711 = vadd.f32 %v710, 0.041655596
    %v712 = vmul.f32 %v709, %v711
    %v713 = vadd.f32 %v712, -0.4999988
    %v714 = vmul.f32 %v709, %v713
    %v715 = vadd.f32 1.0, %v714
    %v716 = vmul.f32 %v707, %v707
    %v717 = vmul.f32 %v716, -0.00019511016
    %v718 = vadd.f32 %v717, 0.008332121
    %v719 = vmul.f32 %v716, %v718
    %v720 = vadd.f32 %v719, -0.16666654
    %v721 = vmul.f32 %v716, %v720
    %v722 = vadd.f32 %v721, 1.0
    %v723 = vmul.f32 %v722, %v707
    %vm724 = vweird.f32 %v115
    %v725 = vadd.s32 %v708, 3
    %v726 = vand.u32 %v725, 3
    %vm727 = vcmp.lt.s32.totalorder %v726, 2
    %vm728 = vcmp.eq.s32.totalorder %v726, 0
    %v729 = vxor.u32 %v723, 2147483648
    %v730 = vsel %vm728, %v715, %v729
    %vm731 = vcmp.eq.s32.totalorder %v726, 2
    %v732 = vxor.u32 %v715, 2147483648
    %v733 = vsel %vm731, %v732, %v723
    %v734 = vsel %vm727, %v730, %v733
    %v735 = vsel %vm724, nan, %v734
    %v736 = vpack.c.bf16 %v580, %v270
    %v737 = vpack.c.bf16 %v735, %v425
    %v738 = vld [vmem:[#allocation2] sm:$0xff]
    %v739 = vld [vmem:[#allocation2 + $0x8] sm:$0xff]
    %v740 = vld [vmem:[#allocation2 + $0x10] sm:$0xff]
    %v741 = vld [vmem:[#allocation2 + $0x18] sm:$0xff]
    %v742 = vld [vmem:[#allocation2 + $0x20] sm:$0xff]
    %v743 = vld [vmem:[#allocation2 + $0x28] sm:$0xff]
    %v744 = vld [vmem:[#allocation2 + $0x30] sm:$0xff]
    %v745 = vld [vmem:[#allocation2 + $0x38] sm:$0xff]
    %v746 = vld [vmem:[#allocation2 + $0x40] sm:$0xff]
    %v747 = vld [vmem:[#allocation2 + $0x48] sm:$0xff]
    %v748 = vld [vmem:[#allocation2 + $0x50] sm:$0xff]
    %v749 = vld [vmem:[#allocation2 + $0x58] sm:$0xff]
    %v750 = vld [vmem:[#allocation2 + $0x60] sm:$0xff]
    %v751 = vld [vmem:[#allocation2 + $0x68] sm:$0xff]
    %v752 = vld [vmem:[#allocation2 + $0x70] sm:$0xff]
    %v753 = vld [vmem:[#allocation2 + $0x78] sm:$0xff]
    %v754 = vld [vmem:[#allocation2 + $0x80] sm:$0xff]
    %v755 = vld [vmem:[#allocation2 + $0x88] sm:$0xff]
    %v756 = vld [vmem:[#allocation2 + $0x90] sm:$0xff]
    %v757 = vld [vmem:[#allocation2 + $0x98] sm:$0xff]
    %v758 = vld [vmem:[#allocation2 + $0xa0] sm:$0xff]
    %v759 = vld [vmem:[#allocation2 + $0xa8] sm:$0xff]
    %v760 = vld [vmem:[#allocation2 + $0xb0] sm:$0xff]
    %v761 = vld [vmem:[#allocation2 + $0xb8] sm:$0xff]
    %v762 = vld [vmem:[#allocation2 + $0xc0] sm:$0xff]
    %v763 = vld [vmem:[#allocation2 + $0xc8] sm:$0xff]
    %v764 = vld [vmem:[#allocation2 + $0xd0] sm:$0xff]
    %v765 = vld [vmem:[#allocation2 + $0xd8] sm:$0xff]
    %v766 = vld [vmem:[#allocation2 + $0xe0] sm:$0xff]
    %v767 = vld [vmem:[#allocation2 + $0xe8] sm:$0xff]
    %v768 = vld [vmem:[#allocation2 + $0xf0] sm:$0xff]
    %v769 = vld [vmem:[#allocation2 + $0xf8] sm:$0xff]
    %v770 = vld [vmem:[%s5] sm:$0x3]
    %v772 = vperm.slane %v770, 0
    %v773 = vperm.slane %v770, 1
    %v808 = vunpack.c.l.b16 %v738
    %v809 = vunpack.c.h.b16 %v738
    %v810 = vunpack.c.l.b16 %v739
    %v811 = vunpack.c.h.b16 %v739
    %v812 = vunpack.c.l.b16 %v740
    %v813 = vunpack.c.h.b16 %v740
    %v814 = vunpack.c.l.b16 %v741
    %v815 = vunpack.c.h.b16 %v741
    %v816 = vunpack.c.l.b16 %v742
    %v817 = vunpack.c.h.b16 %v742
    %v818 = vunpack.c.l.b16 %v743
    %v819 = vunpack.c.h.b16 %v743
    %v820 = vunpack.c.l.b16 %v744
    %v821 = vunpack.c.h.b16 %v744
    %v822 = vunpack.c.l.b16 %v745
    %v823 = vunpack.c.h.b16 %v745
    %v824 = vunpack.c.l.b16 %v746
    %v825 = vunpack.c.h.b16 %v746
    %v826 = vunpack.c.l.b16 %v747
    %v827 = vunpack.c.h.b16 %v747
    %v828 = vunpack.c.l.b16 %v748
    %v829 = vunpack.c.h.b16 %v748
    %v830 = vunpack.c.l.b16 %v749
    %v831 = vunpack.c.h.b16 %v749
    %v832 = vunpack.c.l.b16 %v750
    %v833 = vunpack.c.h.b16 %v750
    %v834 = vunpack.c.l.b16 %v751
    %v835 = vunpack.c.h.b16 %v751
    %v836 = vunpack.c.l.b16 %v752
    %v837 = vunpack.c.h.b16 %v752
    %v838 = vunpack.c.l.b16 %v753
    %v839 = vunpack.c.h.b16 %v753
    %v840 = vunpack.c.l.b16 %v754
    %v841 = vunpack.c.h.b16 %v754
    %v842 = vunpack.c.l.b16 %v755
    %v843 = vunpack.c.h.b16 %v755
    %v844 = vunpack.c.l.b16 %v756
    %v845 = vunpack.c.h.b16 %v756
    %v846 = vunpack.c.l.b16 %v757
    %v847 = vunpack.c.h.b16 %v757
    %v848 = vunpack.c.l.b16 %v758
    %v849 = vunpack.c.h.b16 %v758
    %v850 = vunpack.c.l.b16 %v759
    %v851 = vunpack.c.h.b16 %v759
    %v852 = vunpack.c.l.b16 %v760
    %v853 = vunpack.c.h.b16 %v760
    %v854 = vunpack.c.l.b16 %v761
    %v855 = vunpack.c.h.b16 %v761
    %v856 = vunpack.c.l.b16 %v762
    %v857 = vunpack.c.h.b16 %v762
    %v858 = vunpack.c.l.b16 %v763
    %v859 = vunpack.c.h.b16 %v763
    %v860 = vunpack.c.l.b16 %v764
    %v861 = vunpack.c.h.b16 %v764
    %v862 = vunpack.c.l.b16 %v765
    %v863 = vunpack.c.h.b16 %v765
    %v864 = vunpack.c.l.b16 %v766
    %v865 = vunpack.c.h.b16 %v766
    %v866 = vunpack.c.l.b16 %v767
    %v867 = vunpack.c.h.b16 %v767
    %v868 = vunpack.c.l.b16 %v768
    %v869 = vunpack.c.h.b16 %v768
    %v870 = vunpack.c.l.b16 %v769
    %v871 = vunpack.c.h.b16 %v769
    %v872 = vpack.c.b16 %v810, %v808
    %v873 = vpack.c.b16 %v811, %v809
    %v874 = vpack.c.b16 %v814, %v812
    %v875 = vpack.c.b16 %v815, %v813
    %v876 = vpack.c.b16 %v818, %v816
    %v877 = vpack.c.b16 %v819, %v817
    %v878 = vpack.c.b16 %v822, %v820
    %v879 = vpack.c.b16 %v823, %v821
    %v880 = vpack.c.b16 %v826, %v824
    %v881 = vpack.c.b16 %v827, %v825
    %v882 = vpack.c.b16 %v830, %v828
    %v883 = vpack.c.b16 %v831, %v829
    %v884 = vpack.c.b16 %v834, %v832
    %v885 = vpack.c.b16 %v835, %v833
    %v886 = vpack.c.b16 %v838, %v836
    %v887 = vpack.c.b16 %v839, %v837
    %v888 = vpack.c.b16 %v842, %v840
    %v889 = vpack.c.b16 %v843, %v841
    %v890 = vpack.c.b16 %v846, %v844
    %v891 = vpack.c.b16 %v847, %v845
    %v892 = vpack.c.b16 %v850, %v848
    %v893 = vpack.c.b16 %v851, %v849
    %v894 = vpack.c.b16 %v854, %v852
    %v895 = vpack.c.b16 %v855, %v853
    %v896 = vpack.c.b16 %v858, %v856
    %v897 = vpack.c.b16 %v859, %v857
    %v898 = vpack.c.b16 %v862, %v860
    %v899 = vpack.c.b16 %v863, %v861
    %v900 = vpack.c.b16 %v866, %v864
    %v901 = vpack.c.b16 %v867, %v865
    %v902 = vpack.c.b16 %v870, %v868
    %v903 = vpack.c.b16 %v871, %v869
    %936 = vmatpush.bf16.msra.mxu0 %v886
    %937 = vmatpush.bf16.msra.mxu0 %v884
    %938 = vmatpush.bf16.msra.mxu0 %v882
    %939 = vmatpush.bf16.msra.mxu0 %v880
    %940 = vmatpush.bf16.msra.mxu0 %v878
    %941 = vmatpush.bf16.msra.mxu0 %v876
    %942 = vmatpush.bf16.msra.mxu0 %v874
    %943 = vmatpush.bf16.msra.mxu0 %v872
    %944 = vmatmul.bf16.gmra.mxu0 %v736
    %v945 = vpop.f32.mrf.mxu0
    %v946 = vadd.f32 %v772, %v945
    %v947 = vpop.f32.mrf.mxu0
    %v948 = vadd.f32 %v772, %v947
    %949 = vdwg.mxu0
    %950 = vmatpush.bf16.msra.mxu0 %v902
    %951 = vmatpush.bf16.msra.mxu0 %v900
    %952 = vmatpush.bf16.msra.mxu0 %v898
    %953 = vmatpush.bf16.msra.mxu0 %v896
    %954 = vmatpush.bf16.msra.mxu0 %v894
    %955 = vmatpush.bf16.msra.mxu0 %v892
    %956 = vmatpush.bf16.msra.mxu0 %v890
    %957 = vmatpush.bf16.msra.mxu0 %v888
    %958 = vmatmul.bf16.gmra.mxu0 %v737
    %v959 = vpop.f32.mrf.mxu0
    %v960 = vadd.f32 %v946, %v959
    %v961 = vpop.f32.mrf.mxu0
    %v962 = vadd.f32 %v948, %v961
    %963 = vdwg.mxu0
    %964 = vmatpush.bf16.msra.mxu0 %v887
    %965 = vmatpush.bf16.msra.mxu0 %v885
    %966 = vmatpush.bf16.msra.mxu0 %v883
    %967 = vmatpush.bf16.msra.mxu0 %v881
    %968 = vmatpush.bf16.msra.mxu0 %v879
    %969 = vmatpush.bf16.msra.mxu0 %v877
    %970 = vmatpush.bf16.msra.mxu0 %v875
    %971 = vmatpush.bf16.msra.mxu0 %v873
    %972 = vmatmul.bf16.gmra.mxu0 %v736
    %v973 = vpop.f32.mrf.mxu0
    %v974 = vadd.f32 %v773, %v973
    %v975 = vpop.f32.mrf.mxu0
    %v976 = vadd.f32 %v773, %v975
    %977 = vdwg.mxu0
    %978 = vmatpush.bf16.msra.mxu0 %v903
    %979 = vmatpush.bf16.msra.mxu0 %v901
    %980 = vmatpush.bf16.msra.mxu0 %v899
    %981 = vmatpush.bf16.msra.mxu0 %v897
    %982 = vmatpush.bf16.msra.mxu0 %v895
    %983 = vmatpush.bf16.msra.mxu0 %v893
    %984 = vmatpush.bf16.msra.mxu0 %v891
    %985 = vmatpush.bf16.msra.mxu0 %v889
    %986 = vmatmul.bf16.gmra.mxu0 %v737
    %v987 = vpop.f32.mrf.mxu0
    %v988 = vadd.f32 %v974, %v987
    %v989 = vpop.f32.mrf.mxu0
    %v990 = vadd.f32 %v976, %v989
    %991 = vdwg.mxu0
    %v992 = vtanh.pop %v960
    %v993 = vtanh.pop %v988
    %v994 = vtanh.pop %v962
    %v995 = vtanh.pop %v990
    %v996 = vmul.f32 %v992, %v993
    %v997 = vmul.f32 %v994, %v995
    %v998 = vpack.c.bf16 %v997, %v996
    %v999 = vld [vmem:[#allocation5] sm:$0xf]
    %v1000 = vld [vmem:[#allocation5 + $0x4] sm:$0xf]
    %v1001 = vld [vmem:[#allocation5 + $0x8] sm:$0xf]
    %v1002 = vld [vmem:[#allocation5 + $0xc] sm:$0xf]
    %v1003 = vld [vmem:[#allocation5 + $0x10] sm:$0xf]
    %v1004 = vld [vmem:[#allocation5 + $0x14] sm:$0xf]
    %v1005 = vld [vmem:[#allocation5 + $0x18] sm:$0xf]
    %v1006 = vld [vmem:[#allocation5 + $0x1c] sm:$0xf]
    %v1007 = vld [vmem:[#allocation5 + $0x20] sm:$0xf]
    %v1008 = vld [vmem:[#allocation5 + $0x24] sm:$0xf]
    %v1009 = vld [vmem:[#allocation5 + $0x28] sm:$0xf]
    %v1010 = vld [vmem:[#allocation5 + $0x2c] sm:$0xf]
    %v1011 = vld [vmem:[#allocation5 + $0x30] sm:$0xf]
    %v1012 = vld [vmem:[#allocation5 + $0x34] sm:$0xf]
    %v1013 = vld [vmem:[#allocation5 + $0x38] sm:$0xf]
    %v1014 = vld [vmem:[#allocation5 + $0x3c] sm:$0xf]
    %v1015 = vld [vmem:[%s7] sm:$0x1]
    %v1017 = vperm.slane %v1015, 0
    %v1035 = vunpack.c.l.b16 %v999
    %v1036 = vunpack.c.l.b16 %v1000
    %v1037 = vunpack.c.l.b16 %v1001
    %v1038 = vunpack.c.l.b16 %v1002
    %v1039 = vunpack.c.l.b16 %v1003
    %v1040 = vunpack.c.l.b16 %v1004
    %v1041 = vunpack.c.l.b16 %v1005
    %v1042 = vunpack.c.l.b16 %v1006
    %v1043 = vunpack.c.l.b16 %v1007
    %v1044 = vunpack.c.l.b16 %v1008
    %v1045 = vunpack.c.l.b16 %v1009
    %v1046 = vunpack.c.l.b16 %v1010
    %v1047 = vunpack.c.l.b16 %v1011
    %v1048 = vunpack.c.l.b16 %v1012
    %v1049 = vunpack.c.l.b16 %v1013
    %v1050 = vunpack.c.l.b16 %v1014
    %v1051 = vpack.c.b16 %v1036, %v1035
    %v1052 = vpack.c.b16 %v1038, %v1037
    %v1053 = vpack.c.b16 %v1040, %v1039
    %v1054 = vpack.c.b16 %v1042, %v1041
    %v1055 = vpack.c.b16 %v1044, %v1043
    %v1056 = vpack.c.b16 %v1046, %v1045
    %v1057 = vpack.c.b16 %v1048, %v1047
    %v1058 = vpack.c.b16 %v1050, %v1049
    %1067 = vmatpush.bf16.msra.mxu0 %v1058
    %1068 = vmatpush.bf16.msra.mxu0 %v1057
    %1069 = vmatpush.bf16.msra.mxu0 %v1056
    %1070 = vmatpush.bf16.msra.mxu0 %v1055
    %1071 = vmatpush.bf16.msra.mxu0 %v1054
    %1072 = vmatpush.bf16.msra.mxu0 %v1053
    %1073 = vmatpush.bf16.msra.mxu0 %v1052
    %1074 = vmatpush.bf16.msra.mxu0 %v1051
    %1075 = vmatmul.bf16.gmra.mxu0 %v998
    %v1076 = vpop.f32.mrf.mxu0
    %v1077 = vadd.f32 %v1017, %v1076
    %v1078 = vpop.f32.mrf.mxu0
    %v1079 = vadd.f32 %v1017, %v1078
    %1080 = vdwg.mxu0
    %v1081 = vpack.c.bf16 %v1077, %v1077
    %v1082 = vpack.c.bf16 %v1079, %v1079
    %1083 = vst [vmem:[#allocation7] sm:$0xf] %v1081
    %1084 = vst [vmem:[#allocation7 + $0x4] sm:$0xf] %v1082
    // Predicated region
    $region42: #{tpu_custom_call.1} parent=1 // pred_check
      _
    $region43: #{tpu_custom_call.1} parent=1 // pred_check_branch
      %1086 = sbr.rel (0) target = $region45
    $region44: #{tpu_custom_call.1} parent=1 // pred_region
      %1088 = vsyncadd [#allocation4], 0
      %s1089 = sshll.u32 [#allocation7], 4
      %s1090 = int_to_ptr.vmem [resolvable:$true] %s1089
      %s1091 = sshll.u32 %s8, 4
      %s1092 = int_to_ptr.hbm [resolvable:$true] %s1091
      %1097 = dma.vmem_to_hbm [thread:$0]  %s1090, 128, %s1092, [#allocation4], 64, 64, 4
    $region45: #{tpu_custom_call.1} parent=1 // pred_fallthru
      _
    // Predicated region
    $region46: #{tpu_custom_call.1} parent=1 // pred_check
      _
    $region47: #{tpu_custom_call.1} parent=1 // pred_check_branch
      %1099 = sbr.rel (0) target = $region49
    $region48: #{tpu_custom_call.1} parent=1 // pred_region
      %1101 = dma.done [#allocation4], 128
    $region49: #{tpu_custom_call.1} parent=1 // pred_fallthru
      _
    %1102 = vsyncpa [#allocation3], 1
    %1103 = vsyncpa [#allocation6], 1
    %1104 = vsyncpa [#allocation4], 1

</llo_original>
